<compile_context>
chip_gen: v6e
topology: v6e:2x2x1
jax: 0.10.0
libtpu: 0.0.40
codegen_flags: <defaults>
</compile_context>

<pallas_src>
import jax
import jax.numpy as jnp
from jax import lax
from jax.experimental import pallas as pl
from jax.experimental.pallas import tpu as pltpu
import numpy as np

_INT32_MAX = np.int32(np.iinfo(np.int32).max)


def _make_fp_kernel(has_p1, num_layers):
    def kernel(*refs):
        out_ref = refs[-1]
        args = refs[:-1]
        i = 0
        x1 = args[i][...].astype(jnp.float32); i += 1   # [3, T]   xyz1 tile (native layout)
        x2 = args[i][...].astype(jnp.float32); i += 1   # [S, 3]   xyz2 (points-on-sublanes)
        p2 = args[i][...]; i += 1                        # [D2, S]  bf16
        if has_p1:
            p1 = args[i][...]; i += 1                    # [D1, T]  bf16

        S = x2.shape[0]
        T = x1.shape[1]

        # --- squared pairwise distances [S, T] via algebraic expansion (MXU) ---
        cross = jnp.dot(x2, x1, preferred_element_type=jnp.float32)   # [S, T]
        sq1 = jnp.sum(x1 * x1, axis=0, keepdims=True)                 # [1, T]
        sq2 = jnp.sum(x2 * x2, axis=1, keepdims=True)                 # [S, 1]
        d = jnp.maximum(sq1 + sq2 - 2.0 * cross, 0.0)                 # [S, T], >= 0

        # --- packed keys: (quantized distance | row index) in one int32 --------
        # Non-negative f32 bitcast to int32 is order-preserving. Clearing the low
        # log2(S_pow2) mantissa bits and OR-ing the row index makes every key in
        # a column unique, so `keys == min(keys)` is the argmin one-hot directly.
        s_pow2 = max(2, pl.next_power_of_2(S))
        high_mask = np.int32(-s_pow2)                                  # ~(s_pow2 - 1)
        iota_s = lax.broadcasted_iota(jnp.int32, (S, T), 0)
        keys = jnp.bitwise_or(
            jnp.bitwise_and(pltpu.bitcast(d, jnp.int32), high_mask), iota_s)

        # --- top-3: three masked mins, one-hot = (keys == kmin) -----------------
        k1 = jnp.min(keys, axis=0, keepdims=True)                      # [1, T]
        m1 = keys == k1
        keys = jnp.where(m1, _INT32_MAX, keys)
        k2 = jnp.min(keys, axis=0, keepdims=True)
        m2 = keys == k2
        keys = jnp.where(m2, _INT32_MAX, keys)
        k3 = jnp.min(keys, axis=0, keepdims=True)
        m3 = keys == k3

        def key_to_recip(k):                                           # [1, T]
            dm = pltpu.bitcast(jnp.bitwise_and(k, high_mask), jnp.float32)
            return 1.0 / (dm + 1e-8)

        r1 = key_to_recip(k1)
        r2 = key_to_recip(k2)
        r3 = key_to_recip(k3)
        inv_sum = pl.reciprocal(r1 + r2 + r3, approx=True)             # [1, T] (EUP)

        # Unnormalized weights (normalization happens AFTER the interp matmul,
        # turning an [S,T] divide into a [D2,T] multiply).
        w = jnp.where(m1, r1,
             jnp.where(m2, r2,
              jnp.where(m3, r3, 0.0))).astype(jnp.bfloat16)            # [S, T]

        # interpolation = index_points + weighted sum, as a dense MXU matmul
        interp = jnp.dot(p2, w, preferred_element_type=jnp.float32) * inv_sum  # [D2, T]
        interp = interp.astype(jnp.bfloat16)

        # --- MLP: 1x1 conv + BN(eval) + ReLU. The BN/conv scale is pre-folded ---
        # into the bf16 weights (wrapper); only shift + ReLU remain here. Layer
        # 0's weight is split so concat([points1, interp]) @ W0 is two matmuls.
        w0b = args[i][...]; i += 1                                     # [C0, D2] bf16
        h = jnp.dot(w0b, interp, preferred_element_type=jnp.float32)   # [C0, T]
        if has_p1:
            w0a = args[i][...]; i += 1                                 # [C0, D1] bf16
            h = h + jnp.dot(w0a, p1, preferred_element_type=jnp.float32)
        sh0 = args[i][...]; i += 1                                     # [C0, 1] f32 shift
        h = jnp.maximum(h + sh0, 0.0)

        for _ in range(1, num_layers):
            wl = args[i][...]; i += 1                                  # [C_l, C_prev] bf16
            shl = args[i][...]; i += 1                                 # [C_l, 1] f32
            h = jnp.dot(wl, h.astype(jnp.bfloat16),
                        preferred_element_type=jnp.float32)
            h = jnp.maximum(h + shl, 0.0)

        out_ref[...] = h.astype(out_ref.dtype)                         # [C_last, T]

    return kernel


def _choose_tile_n(n, target):
    """Largest multiple of 128 that divides n and is <= target (n is a 128-multiple)."""
    if n <= target:
        return n
    t = max(128, (target // 128) * 128)
    while t >= 128:
        if n % t == 0:
            return t
        t -= 128
    return n


def _default_tiling():
    """Per-generation (tile_n_target, vmem_limit_bytes) defaults."""
    try:
        kind = jax.devices()[0].device_kind.lower()
    except Exception:  # pragma: no cover
        kind = ""
    if "v7" in kind:
        # v7x: only 64 MiB physical VMEM, 2 TensorCores -> smaller tiles,
        # explicit budget with headroom. (Grid B*(N/TILE_N) should be even so
        # both cores stay busy; both grid axes are "parallel".)
        return 512, 48 * 1024 * 1024
    if "v5 lite" in kind or "v5e" in kind or "v6" in kind:
        # v5e/v6e: 128 MiB physical; raise the 16/32 MiB scoped default and run
        # bigger tiles to amortize per-step pipeline overhead.
        return 1024, 100 * 1024 * 1024
    return 512, None


def pointnet_fp_forward(xyz1, xyz2, points1, points2, layer_weights, layer_sb,
                        *, tile_n_target=None, vmem_limit_bytes=None,
                        out_dtype=jnp.float32):
    """
    xyz1: [B, 3, N], xyz2: [B, 3, S], points1: [B, D1, N] or None, points2: [B, D2, S]
    layer_weights[0]: [D1 + D2, C0] (or [D2, C0] if points1 is None)
    layer_weights[l>0]: [C_{l-1}, C_l]
    layer_sb[l]: [2, C_l]   (row 0 = folded BN/conv scale, row 1 = folded shift)
    returns: [B, C_last, N]  (PyTorch layout, produced directly by the kernel)

    out_dtype: set to jnp.bfloat16 if the consumer accepts bf16 (halves writeback).
    """
    B, _, N = xyz1.shape
    S = xyz2.shape[2]
    D2 = points2.shape[1]
    # TODO(synk): S == 1 "repeat" branch and S == 2 of the PyTorch module not implemented.
    assert S >= 3, "pointnet_fp_forward requires S >= 3"
    has_p1 = points1 is not None
    num_layers = len(layer_weights)

    if tile_n_target is None or vmem_limit_bytes is None:
        t_def, v_def = _default_tiling()
        if tile_n_target is None:
            tile_n_target = t_def
        if vmem_limit_bytes is None:
            vmem_limit_bytes = v_def

    # Pad N to a multiple of 128 so N-tiling is always available (output trimmed).
    N_pad = ((N + 127) // 128) * 128
    if N_pad != N:
        pad = N_pad - N
        xyz1 = jnp.pad(xyz1, ((0, 0), (0, 0), (0, pad)))
        if has_p1:
            points1 = jnp.pad(points1, ((0, 0), (0, 0), (0, pad)))
    TILE_N = _choose_tile_n(N_pad, tile_n_target)

    x1 = xyz1.astype(jnp.float32)                              # [B, 3, N_pad] (native)
    x2 = jnp.transpose(xyz2, (0, 2, 1)).astype(jnp.float32)    # [B, S, 3]     (tiny)
    p2 = points2.astype(jnp.bfloat16)                          # [B, D2, S]    (native)

    inputs = [x1, x2, p2]
    in_specs = [
        pl.BlockSpec((None, 3, TILE_N), lambda b, n: (b, 0, n)),
        pl.BlockSpec((None, S, 3), lambda b, n: (b, 0, 0)),
        pl.BlockSpec((None, D2, S), lambda b, n: (b, 0, 0)),
    ]
    if has_p1:
        D1 = points1.shape[1]
        inputs.append(points1.astype(jnp.bfloat16))            # [B, D1, N_pad] (native)
        in_specs.append(pl.BlockSpec((None, D1, TILE_N), lambda b, n: (b, 0, n)))

    # Parameters: weights transposed to [C_out, C_in] (conv-style), BN/conv scale
    # folded into the rows in f32 BEFORE the bf16 cast; only the shift is kept
    # as a per-channel f32 column for the in-kernel add.
    params = []
    w0 = layer_weights[0].astype(jnp.float32)
    scale0 = layer_sb[0][0].astype(jnp.float32)
    shift0 = layer_sb[0][1].astype(jnp.float32)
    w0s = jnp.transpose(w0) * scale0[:, None]                  # [C0, Cin] scaled
    if has_p1:
        D1 = points1.shape[1]
        params.append(w0s[:, D1:].astype(jnp.bfloat16))        # w0b [C0, D2]
        params.append(w0s[:, :D1].astype(jnp.bfloat16))        # w0a [C0, D1]
    else:
        params.append(w0s.astype(jnp.bfloat16))
    params.append(shift0[:, None])                             # [C0, 1] f32
    for li in range(1, num_layers):
        wl = jnp.transpose(layer_weights[li].astype(jnp.float32))
        sc = layer_sb[li][0].astype(jnp.float32)
        sh = layer_sb[li][1].astype(jnp.float32)
        params.append((wl * sc[:, None]).astype(jnp.bfloat16))  # [C_l, C_{l-1}]
        params.append(sh[:, None])                              # [C_l, 1]

    for p in params:
        in_specs.append(pl.BlockSpec(p.shape, lambda b, n, nd=p.ndim: (0,) * nd))

    C_last = layer_weights[-1].shape[1]
    kernel = _make_fp_kernel(has_p1, num_layers)

    cp_kwargs = dict(dimension_semantics=("parallel", "parallel"))
    if vmem_limit_bytes is not None:
        cp_kwargs["vmem_limit_bytes"] = int(vmem_limit_bytes)

    out = pl.pallas_call(
        kernel,
        out_shape=jax.ShapeDtypeStruct((B, C_last, N_pad), out_dtype),
        grid=(B, N_pad // TILE_N),
        in_specs=in_specs,
        out_specs=pl.BlockSpec((None, C_last, TILE_N), lambda b, n: (b, 0, n)),
        compiler_params=pltpu.CompilerParams(**cp_kwargs),
    )(*(inputs + params))
    if N_pad != N:
        out = out[:, :, :N]
    return out  # already [B, C_last, N]


def ref_forward(xyz1, xyz2, points1, points2, layer_weights, layer_sb):
    """Pure-JAX f32 reference (mirrors the PyTorch forward, BN in inference mode)."""
    x1 = jnp.transpose(xyz1, (0, 2, 1)).astype(jnp.float32)
    x2 = jnp.transpose(xyz2, (0, 2, 1)).astype(jnp.float32)
    p2 = jnp.transpose(points2, (0, 2, 1)).astype(jnp.float32)
    d = (jnp.sum(x1 * x1, -1)[:, :, None] + jnp.sum(x2 * x2, -1)[:, None, :]
         - 2.0 * jnp.einsum('bnc,bsc->bns', x1, x2))                   # [B, N, S]
    negv, idx = lax.top_k(-d, 3)
    d3 = -negv
    recip = 1.0 / (d3 + 1e-8)
    w = recip / jnp.sum(recip, axis=-1, keepdims=True)                 # [B, N, 3]
    gathered = jax.vmap(lambda pts, ids: pts[ids])(p2, idx)            # [B, N, 3, D2]
    interp = jnp.sum(gathered * w[..., None], axis=2)                  # [B, N, D2]
    if points1 is not None:
        p1 = jnp.transpose(points1, (0, 2, 1))
        h = jnp.concatenate([p1, interp], axis=-1)
    else:
        h = interp
    for wl, sb in zip(layer_weights, layer_sb):
        h = jnp.maximum(h @ wl * sb[0][None, None, :] + sb[1][None, None, :], 0.0)
    return jnp.transpose(h, (0, 2, 1))


if __name__ == "__main__":
    B, N, S, D1, D2 = 2, 256, 64, 16, 32
    mlp = [64, 32]
    in_channel = D1 + D2  # points1 channels + points2 channels

    key = jax.random.PRNGKey(0)
    ks = jax.random.split(key, 8)
    xyz1 = jax.random.normal(ks[0], (B, 3, N), jnp.float32)
    xyz2 = jax.random.normal(ks[1], (B, 3, S), jnp.float32)
    points1 = jax.random.normal(ks[2], (B, D1, N), jnp.float32)
    points2 = jax.random.normal(ks[3], (B, D2, S), jnp.float32)

    # Deterministic parameters. BatchNorm applied in inference mode and folded
    # with the conv bias into per-channel (scale, shift).
    layer_weights, layer_sb = [], []
    last = in_channel
    for li, c in enumerate(mlp):
        kw, kb, kg, kbt, km, kv = jax.random.split(ks[4 + li], 6)
        w = 0.1 * jax.random.normal(kw, (last, c), jnp.float32)   # 1x1 conv weight, [Cin, Cout]
        bias = 0.05 * jax.random.normal(kb, (c,), jnp.float32)
        gamma = 1.0 + 0.1 * jax.random.normal(kg, (c,), jnp.float32)
        beta = 0.05 * jax.random.normal(kbt, (c,), jnp.float32)
        run_mean = 0.1 * jax.random.normal(km, (c,), jnp.float32)
        run_var = 1.0 + 0.1 * jnp.abs(jax.random.normal(kv, (c,), jnp.float32))
        scale = gamma / jnp.sqrt(run_var + 1e-5)
        shift = (bias - run_mean) * scale + beta
        layer_weights.append(w)
        layer_sb.append(jnp.stack([scale, shift], axis=0))        # [2, Cout]
        last = c

    # tile_n_target=128 -> TILE_N=128, grid=(2, 2): exercises the N-tiling path.
    out = pointnet_fp_forward(xyz1, xyz2, points1, points2, layer_weights, layer_sb,
                              tile_n_target=128)
    out = jax.block_until_ready(out)

    ref = ref_forward(xyz1, xyz2, points1, points2, layer_weights, layer_sb)
    assert out.shape == (B, mlp[-1], N)
    # Tolerance accounts for bf16 MXU operands (f32 accumulation), the quantized
    # packed-key distances, and the approx reciprocal in the weight normalization;
    # neighbor selection itself stays exact-ordering f32.
    np.testing.assert_allclose(np.asarray(out), np.asarray(ref), rtol=5e-2, atol=5e-2)
    print("KERNEL_OK")
</pallas_src>

<mosaic_0001>
module attributes {stable_mosaic.version = 11 : i64} {
  func.func @kernel(%arg0: i32, %arg1: i32, %arg2: memref<1x3x128xf32, #tpu.memory_space<vmem>>, %arg3: memref<1x64x3xf32, #tpu.memory_space<vmem>>, %arg4: memref<1x32x64xbf16, #tpu.memory_space<vmem>>, %arg5: memref<1x16x128xbf16, #tpu.memory_space<vmem>>, %arg6: memref<64x32xbf16, #tpu.memory_space<vmem>>, %arg7: memref<64x16xbf16, #tpu.memory_space<vmem>>, %arg8: memref<64x1xf32, #tpu.memory_space<vmem>>, %arg9: memref<32x64xbf16, #tpu.memory_space<vmem>>, %arg10: memref<32x1xf32, #tpu.memory_space<vmem>>, %arg11: memref<1x32x128xf32, #tpu.memory_space<vmem>>) attributes {dimension_semantics = [#tpu.dimension_semantics<parallel>, #tpu.dimension_semantics<parallel>], iteration_bounds = array<i64: 2, 2>, scalar_prefetch = 0 : i64, scratch_operands = 0 : i64, tpu.core_type = #tpu.core_type<tc>, window_params = [{transform_indices = @transform_0, window_bounds = array<i64: 1, 3, 128>}, {transform_indices = @transform_1, window_bounds = array<i64: 1, 64, 3>}, {transform_indices = @transform_2, window_bounds = array<i64: 1, 32, 64>}, {transform_indices = @transform_3, window_bounds = array<i64: 1, 16, 128>}, {pipeline_mode = #tpu.pipeline_mode<synchronous>, transform_indices = @transform_4, window_bounds = array<i64: 64, 32>}, {pipeline_mode = #tpu.pipeline_mode<synchronous>, transform_indices = @transform_5, window_bounds = array<i64: 64, 16>}, {pipeline_mode = #tpu.pipeline_mode<synchronous>, transform_indices = @transform_6, window_bounds = array<i64: 64, 1>}, {pipeline_mode = #tpu.pipeline_mode<synchronous>, transform_indices = @transform_7, window_bounds = array<i64: 32, 64>}, {pipeline_mode = #tpu.pipeline_mode<synchronous>, transform_indices = @transform_8, window_bounds = array<i64: 32, 1>}, {transform_indices = @transform_9, window_bounds = array<i64: 1, 32, 128>}]} {
    %c0 = arith.constant 0 : index
    %c0_0 = arith.constant 0 : index
    %c0_1 = arith.constant 0 : index
    %0 = vector.load %arg2[%c0, %c0_0, %c0_1] : memref<1x3x128xf32, #tpu.memory_space<vmem>>, vector<1x3x128xf32>
    %1 = vector.shape_cast %0 : vector<1x3x128xf32> to vector<3x128xf32>
    %c0_2 = arith.constant 0 : index
    %c0_3 = arith.constant 0 : index
    %c0_4 = arith.constant 0 : index
    %2 = vector.load %arg3[%c0_2, %c0_3, %c0_4] : memref<1x64x3xf32, #tpu.memory_space<vmem>>, vector<1x64x3xf32>
    %3 = vector.shape_cast %2 : vector<1x64x3xf32> to vector<64x3xf32>
    %c0_5 = arith.constant 0 : index
    %c0_6 = arith.constant 0 : index
    %c0_7 = arith.constant 0 : index
    %4 = vector.load %arg4[%c0_5, %c0_6, %c0_7] : memref<1x32x64xbf16, #tpu.memory_space<vmem>>, vector<1x32x64xbf16>
    %5 = vector.shape_cast %4 : vector<1x32x64xbf16> to vector<32x64xbf16>
    %c0_8 = arith.constant 0 : index
    %c0_9 = arith.constant 0 : index
    %c0_10 = arith.constant 0 : index
    %6 = vector.load %arg5[%c0_8, %c0_9, %c0_10] : memref<1x16x128xbf16, #tpu.memory_space<vmem>>, vector<1x16x128xbf16>
    %7 = vector.shape_cast %6 : vector<1x16x128xbf16> to vector<16x128xbf16>
    %cst = arith.constant dense<0.000000e+00> : vector<64x128xf32>
    %8 = tpu.matmul %3, %1, %cst {dimension_numbers = #tpu.dot_dimension_numbers<[1], [0], [0], [1], [0, 0, 1, 1], [], []>} : vector<64x3xf32>, vector<3x128xf32>, vector<64x128xf32> -> vector<64x128xf32>
    %9 = arith.mulf %1, %1 : vector<3x128xf32>
    %cst_11 = arith.constant dense<0.000000e+00> : vector<128xf32>
    %10 = vector.multi_reduction <add>, %9, %cst_11 [0] : vector<3x128xf32> to vector<128xf32>
    %11 = vector.shape_cast %10 : vector<128xf32> to vector<1x128xf32>
    %12 = arith.mulf %3, %3 : vector<64x3xf32>
    %cst_12 = arith.constant dense<0.000000e+00> : vector<64xf32>
    %13 = vector.multi_reduction <add>, %12, %cst_12 [1] : vector<64x3xf32> to vector<64xf32>
    %14 = vector.shape_cast %13 : vector<64xf32> to vector<64x1xf32>
    %15 = vector.broadcast %11 : vector<1x128xf32> to vector<64x128xf32>
    %16 = vector.broadcast %14 : vector<64x1xf32> to vector<64x128xf32>
    %17 = arith.addf %15, %16 : vector<64x128xf32>
    %cst_13 = arith.constant 2.000000e+00 : f32
    %18 = vector.broadcast %cst_13 : f32 to vector<64x128xf32>
    %19 = arith.mulf %18, %8 : vector<64x128xf32>
    %20 = arith.subf %17, %19 : vector<64x128xf32>
    %cst_14 = arith.constant 0.000000e+00 : f32
    %21 = vector.broadcast %cst_14 : f32 to vector<64x128xf32>
    %22 = arith.maximumf %20, %21 : vector<64x128xf32>
    %23 = tpu.iota {dimensions = array<i32: 0>} : vector<64x128xi32>
    %24 = tpu.bitcast %22 : vector<64x128xf32> -> vector<64x128xi32>
    %c-64_i32 = arith.constant -64 : i32
    %25 = vector.broadcast %c-64_i32 : i32 to vector<64x128xi32>
    %26 = arith.andi %24, %25 : vector<64x128xi32>
    %27 = arith.ori %26, %23 : vector<64x128xi32>
    %cst_15 = arith.constant dense<2147483647> : vector<128xi32>
    %28 = vector.multi_reduction <minsi>, %27, %cst_15 [0] : vector<64x128xi32> to vector<128xi32>
    %29 = vector.shape_cast %28 : vector<128xi32> to vector<1x128xi32>
    %30 = vector.broadcast %29 : vector<1x128xi32> to vector<64x128xi32>
    %31 = arith.cmpi eq, %27, %30 : vector<64x128xi32>
    %c2147483647_i32 = arith.constant 2147483647 : i32
    %32 = vector.broadcast %c2147483647_i32 : i32 to vector<64x128xi32>
    %33 = arith.select %31, %32, %27 : vector<64x128xi1>, vector<64x128xi32>
    %cst_16 = arith.constant dense<2147483647> : vector<128xi32>
    %34 = vector.multi_reduction <minsi>, %33, %cst_16 [0] : vector<64x128xi32> to vector<128xi32>
    %35 = vector.shape_cast %34 : vector<128xi32> to vector<1x128xi32>
    %36 = vector.broadcast %35 : vector<1x128xi32> to vector<64x128xi32>
    %37 = arith.cmpi eq, %33, %36 : vector<64x128xi32>
    %c2147483647_i32_17 = arith.constant 2147483647 : i32
    %38 = vector.broadcast %c2147483647_i32_17 : i32 to vector<64x128xi32>
    %39 = arith.select %37, %38, %33 : vector<64x128xi1>, vector<64x128xi32>
    %cst_18 = arith.constant dense<2147483647> : vector<128xi32>
    %40 = vector.multi_reduction <minsi>, %39, %cst_18 [0] : vector<64x128xi32> to vector<128xi32>
    %41 = vector.shape_cast %40 : vector<128xi32> to vector<1x128xi32>
    %42 = vector.broadcast %41 : vector<1x128xi32> to vector<64x128xi32>
    %43 = arith.cmpi eq, %39, %42 : vector<64x128xi32>
    %c-64_i32_19 = arith.constant -64 : i32
    %44 = vector.broadcast %c-64_i32_19 : i32 to vector<1x128xi32>
    %45 = arith.andi %29, %44 : vector<1x128xi32>
    %46 = tpu.bitcast %45 : vector<1x128xi32> -> vector<1x128xf32>
    %cst_20 = arith.constant 9.99999993E-9 : f32
    %47 = vector.broadcast %cst_20 : f32 to vector<1x128xf32>
    %48 = arith.addf %46, %47 : vector<1x128xf32>
    %cst_21 = arith.constant 1.000000e+00 : f32
    %49 = vector.broadcast %cst_21 : f32 to vector<1x128xf32>
    %50 = arith.divf %49, %48 : vector<1x128xf32>
    %c-64_i32_22 = arith.constant -64 : i32
    %51 = vector.broadcast %c-64_i32_22 : i32 to vector<1x128xi32>
    %52 = arith.andi %35, %51 : vector<1x128xi32>
    %53 = tpu.bitcast %52 : vector<1x128xi32> -> vector<1x128xf32>
    %cst_23 = arith.constant 9.99999993E-9 : f32
    %54 = vector.broadcast %cst_23 : f32 to vector<1x128xf32>
    %55 = arith.addf %53, %54 : vector<1x128xf32>
    %cst_24 = arith.constant 1.000000e+00 : f32
    %56 = vector.broadcast %cst_24 : f32 to vector<1x128xf32>
    %57 = arith.divf %56, %55 : vector<1x128xf32>
    %c-64_i32_25 = arith.constant -64 : i32
    %58 = vector.broadcast %c-64_i32_25 : i32 to vector<1x128xi32>
    %59 = arith.andi %41, %58 : vector<1x128xi32>
    %60 = tpu.bitcast %59 : vector<1x128xi32> -> vector<1x128xf32>
    %cst_26 = arith.constant 9.99999993E-9 : f32
    %61 = vector.broadcast %cst_26 : f32 to vector<1x128xf32>
    %62 = arith.addf %60, %61 : vector<1x128xf32>
    %cst_27 = arith.constant 1.000000e+00 : f32
    %63 = vector.broadcast %cst_27 : f32 to vector<1x128xf32>
    %64 = arith.divf %63, %62 : vector<1x128xf32>
    %65 = arith.addf %50, %57 : vector<1x128xf32>
    %66 = arith.addf %65, %64 : vector<1x128xf32>
    %67 = tpu.reciprocal %66 {approx = true} : vector<1x128xf32> -> vector<1x128xf32>
    %cst_28 = arith.constant 0.000000e+00 : f32
    %68 = vector.shape_cast %64 : vector<1x128xf32> to vector<1x128xf32>
    %69 = vector.broadcast %68 : vector<1x128xf32> to vector<64x128xf32>
    %70 = vector.broadcast %cst_28 : f32 to vector<64x128xf32>
    %71 = arith.select %43, %69, %70 : vector<64x128xi1>, vector<64x128xf32>
    %72 = vector.shape_cast %57 : vector<1x128xf32> to vector<1x128xf32>
    %73 = vector.broadcast %72 : vector<1x128xf32> to vector<64x128xf32>
    %74 = arith.select %37, %73, %71 : vector<64x128xi1>, vector<64x128xf32>
    %75 = vector.shape_cast %50 : vector<1x128xf32> to vector<1x128xf32>
    %76 = vector.broadcast %75 : vector<1x128xf32> to vector<64x128xf32>
    %77 = arith.select %31, %76, %74 : vector<64x128xi1>, vector<64x128xf32>
    %78 = arith.truncf %77 : vector<64x128xf32> to vector<64x128xbf16>
    %cst_29 = arith.constant dense<0.000000e+00> : vector<32x128xf32>
    %79 = tpu.matmul %5, %78, %cst_29 {dimension_numbers = #tpu.dot_dimension_numbers<[1], [0], [0], [1], [0, 0, 1, 1], [], []>} : vector<32x64xbf16>, vector<64x128xbf16>, vector<32x128xf32> -> vector<32x128xf32>
    %80 = vector.broadcast %67 : vector<1x128xf32> to vector<32x128xf32>
    %81 = arith.mulf %79, %80 : vector<32x128xf32>
    %82 = arith.truncf %81 : vector<32x128xf32> to vector<32x128xbf16>
    %c0_30 = arith.constant 0 : index
    %c0_31 = arith.constant 0 : index
    %83 = vector.load %arg6[%c0_30, %c0_31] : memref<64x32xbf16, #tpu.memory_space<vmem>>, vector<64x32xbf16>
    %cst_32 = arith.constant dense<0.000000e+00> : vector<64x128xf32>
    %84 = tpu.matmul %83, %82, %cst_32 {dimension_numbers = #tpu.dot_dimension_numbers<[1], [0], [0], [1], [0, 0, 1, 1], [], []>} : vector<64x32xbf16>, vector<32x128xbf16>, vector<64x128xf32> -> vector<64x128xf32>
    %c0_33 = arith.constant 0 : index
    %c0_34 = arith.constant 0 : index
    %85 = vector.load %arg7[%c0_33, %c0_34] : memref<64x16xbf16, #tpu.memory_space<vmem>>, vector<64x16xbf16>
    %cst_35 = arith.constant dense<0.000000e+00> : vector<64x128xf32>
    %86 = tpu.matmul %85, %7, %cst_35 {dimension_numbers = #tpu.dot_dimension_numbers<[1], [0], [0], [1], [0, 0, 1, 1], [], []>} : vector<64x16xbf16>, vector<16x128xbf16>, vector<64x128xf32> -> vector<64x128xf32>
    %87 = arith.addf %84, %86 : vector<64x128xf32>
    %c0_36 = arith.constant 0 : index
    %c0_37 = arith.constant 0 : index
    %88 = vector.load %arg8[%c0_36, %c0_37] : memref<64x1xf32, #tpu.memory_space<vmem>>, vector<64x1xf32>
    %89 = vector.broadcast %88 : vector<64x1xf32> to vector<64x128xf32>
    %90 = arith.addf %87, %89 : vector<64x128xf32>
    %cst_38 = arith.constant 0.000000e+00 : f32
    %91 = vector.broadcast %cst_38 : f32 to vector<64x128xf32>
    %92 = arith.maximumf %90, %91 : vector<64x128xf32>
    %c0_39 = arith.constant 0 : index
    %c0_40 = arith.constant 0 : index
    %93 = vector.load %arg9[%c0_39, %c0_40] : memref<32x64xbf16, #tpu.memory_space<vmem>>, vector<32x64xbf16>
    %c0_41 = arith.constant 0 : index
    %c0_42 = arith.constant 0 : index
    %94 = vector.load %arg10[%c0_41, %c0_42] : memref<32x1xf32, #tpu.memory_space<vmem>>, vector<32x1xf32>
    %95 = arith.truncf %92 : vector<64x128xf32> to vector<64x128xbf16>
    %cst_43 = arith.constant dense<0.000000e+00> : vector<32x128xf32>
    %96 = tpu.matmul %93, %95, %cst_43 {dimension_numbers = #tpu.dot_dimension_numbers<[1], [0], [0], [1], [0, 0, 1, 1], [], []>} : vector<32x64xbf16>, vector<64x128xbf16>, vector<32x128xf32> -> vector<32x128xf32>
    %97 = vector.broadcast %94 : vector<32x1xf32> to vector<32x128xf32>
    %98 = arith.addf %96, %97 : vector<32x128xf32>
    %cst_44 = arith.constant 0.000000e+00 : f32
    %99 = vector.broadcast %cst_44 : f32 to vector<32x128xf32>
    %100 = arith.maximumf %98, %99 : vector<32x128xf32>
    %c0_45 = arith.constant 0 : index
    %c0_46 = arith.constant 0 : index
    %c0_47 = arith.constant 0 : index
    %101 = vector.load %arg11[%c0_45, %c0_46, %c0_47] : memref<1x32x128xf32, #tpu.memory_space<vmem>>, vector<1x32x128xf32>
    %102 = vector.shape_cast %101 : vector<1x32x128xf32> to vector<32x128xf32>
    %103 = vector.shape_cast %100 : vector<32x128xf32> to vector<1x32x128xf32>
    tpu.vector_store %arg11[%c0_45, %c0_46, %c0_47], %103 {strides = array<i32>} : memref<1x32x128xf32, #tpu.memory_space<vmem>>, vector<1x32x128xf32>,
    return
  }
  func.func @transform_0(%arg0: i32, %arg1: i32) -> (i32, i32, i32) {
    %c0_i32 = arith.constant 0 : i32
    %c0_i32_0 = arith.constant 0 : i32
    return %arg0, %c0_i32, %arg1 : i32, i32, i32
  }
  func.func @transform_1(%arg0: i32, %arg1: i32) -> (i32, i32, i32) {
    %c0_i32 = arith.constant 0 : i32
    %c0_i32_0 = arith.constant 0 : i32
    %c0_i32_1 = arith.constant 0 : i32
    return %arg0, %c0_i32, %c0_i32_0 : i32, i32, i32
  }
  func.func @transform_2(%arg0: i32, %arg1: i32) -> (i32, i32, i32) {
    %c0_i32 = arith.constant 0 : i32
    %c0_i32_0 = arith.constant 0 : i32
    %c0_i32_1 = arith.constant 0 : i32
    return %arg0, %c0_i32, %c0_i32_0 : i32, i32, i32
  }
  func.func @transform_3(%arg0: i32, %arg1: i32) -> (i32, i32, i32) {
    %c0_i32 = arith.constant 0 : i32
    %c0_i32_0 = arith.constant 0 : i32
    return %arg0, %c0_i32, %arg1 : i32, i32, i32
  }
  func.func @transform_4(%arg0: i32, %arg1: i32) -> (i32, i32) {
    %c0_i32 = arith.constant 0 : i32
    %c0_i32_0 = arith.constant 0 : i32
    %c0_i32_1 = arith.constant 0 : i32
    return %c0_i32, %c0_i32_0 : i32, i32
  }
  func.func @transform_5(%arg0: i32, %arg1: i32) -> (i32, i32) {
    %c0_i32 = arith.constant 0 : i32
    %c0_i32_0 = arith.constant 0 : i32
    %c0_i32_1 = arith.constant 0 : i32
    return %c0_i32, %c0_i32_0 : i32, i32
  }
  func.func @transform_6(%arg0: i32, %arg1: i32) -> (i32, i32) {
    %c0_i32 = arith.constant 0 : i32
    %c0_i32_0 = arith.constant 0 : i32
    %c0_i32_1 = arith.constant 0 : i32
    return %c0_i32, %c0_i32_0 : i32, i32
  }
  func.func @transform_7(%arg0: i32, %arg1: i32) -> (i32, i32) {
    %c0_i32 = arith.constant 0 : i32
    %c0_i32_0 = arith.constant 0 : i32
    %c0_i32_1 = arith.constant 0 : i32
    return %c0_i32, %c0_i32_0 : i32, i32
  }
  func.func @transform_8(%arg0: i32, %arg1: i32) -> (i32, i32) {
    %c0_i32 = arith.constant 0 : i32
    %c0_i32_0 = arith.constant 0 : i32
    %c0_i32_1 = arith.constant 0 : i32
    return %c0_i32, %c0_i32_0 : i32, i32
  }
  func.func @transform_9(%arg0: i32, %arg1: i32) -> (i32, i32, i32) {
    %c0_i32 = arith.constant 0 : i32
    %c0_i32_0 = arith.constant 0 : i32
    return %arg0, %c0_i32, %arg1 : i32, i32, i32
  }
}

</mosaic_0001>

<llo_original>
// kernel: tpu_custom_call.1
$region0: #{tpu_custom_call.1}
  #allocation0 [shape = 'u32[]', space=smem, size = 0x4, offset = 0x4, fixed_abs, tag = 'smem constant byte address 0x4 - core index']
  #allocation1 [shape = 'u32[144,128]{1,0:T(1,128)}', space=vmem, size = 0x12000, scoped, tag = 'internal scratch']
  %s0 = inlined_call_operand.vmem [shape: f32[2,3,256], index: 0, kind: input, shape index: {}]
  %s1 = inlined_call_operand.vmem [shape: f32[2,64,3], index: 1, kind: input, shape index: {}]
  %s2 = inlined_call_operand.vmem [shape: bf16[2,32,64], index: 2, kind: input, shape index: {}]
  %s3 = inlined_call_operand.vmem [shape: bf16[2,16,256], index: 3, kind: input, shape index: {}]
  %s4 = inlined_call_operand.vmem [shape: bf16[64,32], index: 4, kind: input, shape index: {}]
  %s5 = inlined_call_operand.vmem [shape: bf16[64,16], index: 5, kind: input, shape index: {}]
  %s6 = inlined_call_operand.vmem [shape: f32[64,1], index: 6, kind: input, shape index: {}]
  %s7 = inlined_call_operand.vmem [shape: bf16[32,64], index: 7, kind: input, shape index: {}]
  %s8 = inlined_call_operand.vmem [shape: f32[32,1], index: 8, kind: input, shape index: {}]
  %s9 = inlined_call_operand.hbm [shape: f32[2,32,256], index: 9, kind: output, shape index: {}]
  %s10 = sld [smem:[#allocation0]]
  $region110: #{tpu_custom_call.1} parent=0
    _
  %s12 = ssub.s32 1, %s10
  %s13 = scalar_select 0, %s12, %s10
  $region1: #{tpu_custom_call.1} parent=0
    #allocation2 [shape = 'u8[8192]{0}', space=vmem, size = 0x2000, scoped, tag = 'input window, operand 3']
    #allocation3 [shape = 'u8[32768]{0}', space=vmem, size = 0x8000, scoped, tag = 'output window, operand 0']
    #allocation4 [shape = 's32[2]{0}', space=sflag, size = 0x8, scoped, tag = 'scoped memory for tpu_custom_call.1']
    %14 = vsyncpa [#allocation4], 0
    %s15 = scalar_lea.sflag [#allocation4], 1
    %16 = vsyncpa %s15, 0
    loop: start=0, step=1, limit=6
    $region2: #{tpu_custom_call.1} parent=1 // loop_pre_header
      _
    $region3: #{tpu_custom_call.1} parent=1 // loop_header
      %s18 = sphi 0, %s22
      %p19 = scmp.ge.s32.totalorder %s18, 6
      %s25 = sphi 0, %s37
      %s26 = sphi 0, %s33
      %s27 = sphi 0, %s25
      %s28 = sphi 0, %s26
      %s29 = sphi 0, %s27
      %s30 = sphi 0, %s28
      %s42 = sphi 0, %s44
      %s45 = sphi 0, %s42
      %s46 = sphi 0, %s45
      %s62 = sphi 0, %s46
      %s68 = sphi 0, %s70
      %s71 = sphi 0, %s68
      %s72 = sphi 0, %s71
      %s88 = sphi 0, %s72
      %s94 = sphi 0, %s96
      %s97 = sphi 0, %s94
      %s98 = sphi 0, %s97
      %s114 = sphi 0, %s98
      %s122 = sphi 0, %s124
      %s125 = sphi 0, %s122
      %s126 = sphi 0, %s125
      %s142 = sphi 0, %s126
      %s146 = sphi 0, %s146
      %s148 = sphi 0, %s146
      %s149 = sphi 0, %s148
      %s163 = sphi 0, %s149
      %s167 = sphi 0, %s167
      %s169 = sphi 0, %s167
      %s170 = sphi 0, %s169
      %s184 = sphi 0, %s170
      %s188 = sphi 0, %s188
      %s190 = sphi 0, %s188
      %s191 = sphi 0, %s190
      %s205 = sphi 0, %s191
      %s209 = sphi 0, %s209
      %s211 = sphi 0, %s209
      %s212 = sphi 0, %s211
      %s226 = sphi 0, %s212
      %s230 = sphi 0, %s230
      %s232 = sphi 0, %s230
      %s233 = sphi 0, %s232
      %s247 = sphi 0, %s233
      %s255 = sphi 0, %s257
      %s258 = sphi 0, %s255
      %s259 = sphi 0, %s258
      %s275 = sphi 0, %s259
    $region4: #{tpu_custom_call.1} parent=1 // loop_header_branch
      %21 = sbr.rel (%p19) target = $region8
    $region5: #{tpu_custom_call.1} parent=1 // loop_body
      %s23 = ssub.s32 %s18, 1
      %s24 = ssub.s32 %s18, 2
      %s31 = sadd.s32 1, %s26
      %p32 = scmp.ge.s32.totalorder %s31, 2
      %s33 = scalar_select %p32, 0, %s31
      %s34 = sadd.s32 1, %s25
      %s35 = scalar_select %p32, %s34, %s25
      %p36 = scmp.ge.s32.totalorder %s35, 2
      %s37 = scalar_select %p36, 0, %s35
      %s38 = ssub.s32 %s25, %s37
      %s39 = ssub.s32 %s26, %s33
      %s40 = sor.u32 %s38, %s39
      %p41 = scmp.eq.s32.totalorder %s40, 0
      %s43 = sadd.s32 %s42, 1
      %s44 = scalar_select %p41, %s42, %s43
      %p47 = pneg %p41
      %p48 = scmp.eq.s32.totalorder %s18, 3
      %p49 = por %p47, %p48
      %p50 = scmp.ne.s32.totalorder %s42, %s45
      %p51 = scmp.eq.s32.totalorder %s18, 0
      %p52 = por %p50, %p51
      %p53 = scmp.ne.s32.totalorder %s42, %s45
      %p54 = scmp.eq.s32.totalorder %s23, 3
      %p55 = por %p53, %p54
      %p56 = scmp.ne.s32.totalorder %s45, %s46
      %p57 = scmp.eq.s32.totalorder %s23, 0
      %p58 = por %p56, %p57
      %p59 = scmp.ne.s32.totalorder %s45, %s46
      %p60 = scmp.eq.s32.totalorder %s24, 3
      %p61 = por %p59, %p60
      %p63 = scmp.ne.s32.totalorder %s46, %s62
      %p64 = scmp.eq.s32.totalorder %s24, 0
      %p65 = por %p63, %p64
      %s66 = ssub.s32 %s25, %s37
      %p67 = scmp.eq.s32.totalorder %s66, 0
      %s69 = sadd.s32 %s68, 1
      %s70 = scalar_select %p67, %s68, %s69
      %p73 = pneg %p67
      %p74 = scmp.eq.s32.totalorder %s18, 3
      %p75 = por %p73, %p74
      %p76 = scmp.ne.s32.totalorder %s68, %s71
      %p77 = scmp.eq.s32.totalorder %s18, 0
      %p78 = por %p76, %p77
      %p79 = scmp.ne.s32.totalorder %s68, %s71
      %p80 = scmp.eq.s32.totalorder %s23, 3
      %p81 = por %p79, %p80
      %p82 = scmp.ne.s32.totalorder %s71, %s72
      %p83 = scmp.eq.s32.totalorder %s23, 0
      %p84 = por %p82, %p83
      %p85 = scmp.ne.s32.totalorder %s71, %s72
      %p86 = scmp.eq.s32.totalorder %s24, 3
      %p87 = por %p85, %p86
      %p89 = scmp.ne.s32.totalorder %s72, %s88
      %p90 = scmp.eq.s32.totalorder %s24, 0
      %p91 = por %p89, %p90
      %s92 = ssub.s32 %s25, %s37
      %p93 = scmp.eq.s32.totalorder %s92, 0
      %s95 = sadd.s32 %s94, 1
      %s96 = scalar_select %p93, %s94, %s95
      %p99 = pneg %p93
      %p100 = scmp.eq.s32.totalorder %s18, 3
      %p101 = por %p99, %p100
      %p102 = scmp.ne.s32.totalorder %s94, %s97
      %p103 = scmp.eq.s32.totalorder %s18, 0
      %p104 = por %p102, %p103
      %p105 = scmp.ne.s32.totalorder %s94, %s97
      %p106 = scmp.eq.s32.totalorder %s23, 3
      %p107 = por %p105, %p106
      %p108 = scmp.ne.s32.totalorder %s97, %s98
      %p109 = scmp.eq.s32.totalorder %s23, 0
      %p110 = por %p108, %p109
      %p111 = scmp.ne.s32.totalorder %s97, %s98
      %p112 = scmp.eq.s32.totalorder %s24, 3
      %p113 = por %p111, %p112
      %p115 = scmp.ne.s32.totalorder %s98, %s114
      %p116 = scmp.eq.s32.totalorder %s24, 0
      %p117 = por %p115, %p116
      %s118 = ssub.s32 %s25, %s37
      %s119 = ssub.s32 %s26, %s33
      %s120 = sor.u32 %s118, %s119
      %p121 = scmp.eq.s32.totalorder %s120, 0
      %s123 = sadd.s32 %s122, 1
      %s124 = scalar_select %p121, %s122, %s123
      %p127 = pneg %p121
      %p128 = scmp.eq.s32.totalorder %s18, 3
      %p129 = por %p127, %p128
      %p130 = scmp.ne.s32.totalorder %s122, %s125
      %p131 = scmp.eq.s32.totalorder %s18, 0
      %p132 = por %p130, %p131
      %p133 = scmp.ne.s32.totalorder %s122, %s125
      %p134 = scmp.eq.s32.totalorder %s23, 3
      %p135 = por %p133, %p134
      %p136 = scmp.ne.s32.totalorder %s125, %s126
      %p137 = scmp.eq.s32.totalorder %s23, 0
      %p138 = por %p136, %p137
      %p139 = scmp.ne.s32.totalorder %s125, %s126
      %p140 = scmp.eq.s32.totalorder %s24, 3
      %p141 = por %p139, %p140
      %p143 = scmp.ne.s32.totalorder %s126, %s142
      %p144 = scmp.eq.s32.totalorder %s24, 0
      %p145 = por %p143, %p144
      %s147 = sadd.s32 %s146, 1
      %p150 = scmp.eq.s32.totalorder %s18, 3
      %p151 = scmp.ne.s32.totalorder %s146, %s148
      %p152 = scmp.eq.s32.totalorder %s18, 0
      %p153 = por %p151, %p152
      %p154 = scmp.ne.s32.totalorder %s146, %s148
      %p155 = scmp.eq.s32.totalorder %s23, 3
      %p156 = por %p154, %p155
      %p157 = scmp.ne.s32.totalorder %s148, %s149
      %p158 = scmp.eq.s32.totalorder %s23, 0
      %p159 = por %p157, %p158
      %p160 = scmp.ne.s32.totalorder %s148, %s149
      %p161 = scmp.eq.s32.totalorder %s24, 3
      %p162 = por %p160, %p161
      %p164 = scmp.ne.s32.totalorder %s149, %s163
      %p165 = scmp.eq.s32.totalorder %s24, 0
      %p166 = por %p164, %p165
      %s168 = sadd.s32 %s167, 1
      %p171 = scmp.eq.s32.totalorder %s18, 3
      %p172 = scmp.ne.s32.totalorder %s167, %s169
      %p173 = scmp.eq.s32.totalorder %s18, 0
      %p174 = por %p172, %p173
      %p175 = scmp.ne.s32.totalorder %s167, %s169
      %p176 = scmp.eq.s32.totalorder %s23, 3
      %p177 = por %p175, %p176
      %p178 = scmp.ne.s32.totalorder %s169, %s170
      %p179 = scmp.eq.s32.totalorder %s23, 0
      %p180 = por %p178, %p179
      %p181 = scmp.ne.s32.totalorder %s169, %s170
      %p182 = scmp.eq.s32.totalorder %s24, 3
      %p183 = por %p181, %p182
      %p185 = scmp.ne.s32.totalorder %s170, %s184
      %p186 = scmp.eq.s32.totalorder %s24, 0
      %p187 = por %p185, %p186
      %s189 = sadd.s32 %s188, 1
      %p192 = scmp.eq.s32.totalorder %s18, 3
      %p193 = scmp.ne.s32.totalorder %s188, %s190
      %p194 = scmp.eq.s32.totalorder %s18, 0
      %p195 = por %p193, %p194
      %p196 = scmp.ne.s32.totalorder %s188, %s190
      %p197 = scmp.eq.s32.totalorder %s23, 3
      %p198 = por %p196, %p197
      %p199 = scmp.ne.s32.totalorder %s190, %s191
      %p200 = scmp.eq.s32.totalorder %s23, 0
      %p201 = por %p199, %p200
      %p202 = scmp.ne.s32.totalorder %s190, %s191
      %p203 = scmp.eq.s32.totalorder %s24, 3
      %p204 = por %p202, %p203
      %p206 = scmp.ne.s32.totalorder %s191, %s205
      %p207 = scmp.eq.s32.totalorder %s24, 0
      %p208 = por %p206, %p207
      %s210 = sadd.s32 %s209, 1
      %p213 = scmp.eq.s32.totalorder %s18, 3
      %p214 = scmp.ne.s32.totalorder %s209, %s211
      %p215 = scmp.eq.s32.totalorder %s18, 0
      %p216 = por %p214, %p215
      %p217 = scmp.ne.s32.totalorder %s209, %s211
      %p218 = scmp.eq.s32.totalorder %s23, 3
      %p219 = por %p217, %p218
      %p220 = scmp.ne.s32.totalorder %s211, %s212
      %p221 = scmp.eq.s32.totalorder %s23, 0
      %p222 = por %p220, %p221
      %p223 = scmp.ne.s32.totalorder %s211, %s212
      %p224 = scmp.eq.s32.totalorder %s24, 3
      %p225 = por %p223, %p224
      %p227 = scmp.ne.s32.totalorder %s212, %s226
      %p228 = scmp.eq.s32.totalorder %s24, 0
      %p229 = por %p227, %p228
      %s231 = sadd.s32 %s230, 1
      %p234 = scmp.eq.s32.totalorder %s18, 3
      %p235 = scmp.ne.s32.totalorder %s230, %s232
      %p236 = scmp.eq.s32.totalorder %s18, 0
      %p237 = por %p235, %p236
      %p238 = scmp.ne.s32.totalorder %s230, %s232
      %p239 = scmp.eq.s32.totalorder %s23, 3
      %p240 = por %p238, %p239
      %p241 = scmp.ne.s32.totalorder %s232, %s233
      %p242 = scmp.eq.s32.totalorder %s23, 0
      %p243 = por %p241, %p242
      %p244 = scmp.ne.s32.totalorder %s232, %s233
      %p245 = scmp.eq.s32.totalorder %s24, 3
      %p246 = por %p244, %p245
      %p248 = scmp.ne.s32.totalorder %s233, %s247
      %p249 = scmp.eq.s32.totalorder %s24, 0
      %p250 = por %p248, %p249
      %s251 = ssub.s32 %s25, %s37
      %s252 = ssub.s32 %s26, %s33
      %s253 = sor.u32 %s251, %s252
      %p254 = scmp.eq.s32.totalorder %s253, 0
      %s256 = sadd.s32 %s255, 1
      %s257 = scalar_select %p254, %s255, %s256
      %p260 = pneg %p254
      %p261 = scmp.eq.s32.totalorder %s18, 3
      %p262 = por %p260, %p261
      %p263 = scmp.ne.s32.totalorder %s255, %s258
      %p264 = scmp.eq.s32.totalorder %s18, 0
      %p265 = por %p263, %p264
      %p266 = scmp.ne.s32.totalorder %s255, %s258
      %p267 = scmp.eq.s32.totalorder %s23, 3
      %p268 = por %p266, %p267
      %p269 = scmp.ne.s32.totalorder %s258, %s259
      %p270 = scmp.eq.s32.totalorder %s23, 0
      %p271 = por %p269, %p270
      %p272 = scmp.ne.s32.totalorder %s258, %s259
      %p273 = scmp.eq.s32.totalorder %s24, 3
      %p274 = por %p272, %p273
      %p276 = scmp.ne.s32.totalorder %s259, %s275
      %p277 = scmp.eq.s32.totalorder %s24, 0
      %p278 = por %p276, %p277
      %p279 = scmp.le.s32.totalorder 1, %s18
      %p280 = scmp.lt.s32.totalorder %s18, 5
      %p281 = pnand %p279, %p280
      %p282 = pneg %p281
      // Predicated region
      $region9: #{tpu_custom_call.1} parent=5 // pred_check
        _
      $region10: #{tpu_custom_call.1} parent=5 // pred_check_branch
        %284 = sbr.rel (%p281) target = $region12
      $region11: #{tpu_custom_call.1} parent=5 // pred_region
        %s285 = ssub.s32 %s18, 1
        // Predicated region
        $region13: #{tpu_custom_call.1} parent=11 // pred_check
          %p286 = pneg %p159
        $region14: #{tpu_custom_call.1} parent=11 // pred_check_branch
          %288 = sbr.rel (%p286) target = $region16
        $region15: #{tpu_custom_call.1} parent=11 // pred_region
          _
        $region16: #{tpu_custom_call.1} parent=11 // pred_fallthru
          _
        // Predicated region
        $region17: #{tpu_custom_call.1} parent=11 // pred_check
          %p289 = pneg %p180
        $region18: #{tpu_custom_call.1} parent=11 // pred_check_branch
          %291 = sbr.rel (%p289) target = $region20
        $region19: #{tpu_custom_call.1} parent=11 // pred_region
          _
        $region20: #{tpu_custom_call.1} parent=11 // pred_fallthru
          _
        // Predicated region
        $region21: #{tpu_custom_call.1} parent=11 // pred_check
          %p292 = pneg %p201
        $region22: #{tpu_custom_call.1} parent=11 // pred_check_branch
          %294 = sbr.rel (%p292) target = $region24
        $region23: #{tpu_custom_call.1} parent=11 // pred_region
          _
        $region24: #{tpu_custom_call.1} parent=11 // pred_fallthru
          _
        // Predicated region
        $region25: #{tpu_custom_call.1} parent=11 // pred_check
          %p295 = pneg %p222
        $region26: #{tpu_custom_call.1} parent=11 // pred_check_branch
          %297 = sbr.rel (%p295) target = $region28
        $region27: #{tpu_custom_call.1} parent=11 // pred_region
          _
        $region28: #{tpu_custom_call.1} parent=11 // pred_fallthru
          _
        // Predicated region
        $region29: #{tpu_custom_call.1} parent=11 // pred_check
          %p298 = pneg %p243
        $region30: #{tpu_custom_call.1} parent=11 // pred_check_branch
          %300 = sbr.rel (%p298) target = $region32
        $region31: #{tpu_custom_call.1} parent=11 // pred_region
          _
        $region32: #{tpu_custom_call.1} parent=11 // pred_fallthru
          _
      $region12: #{tpu_custom_call.1} parent=5 // pred_fallthru
        _
      %p301 = scmp.lt.s32.totalorder %s18, 4
      // Predicated region
      $region33: #{tpu_custom_call.1} parent=5 // pred_check
        %p302 = pneg %p301
      $region34: #{tpu_custom_call.1} parent=5 // pred_check_branch
        %304 = sbr.rel (%p302) target = $region36
      $region35: #{tpu_custom_call.1} parent=5 // pred_region
        // Predicated region
        $region37: #{tpu_custom_call.1} parent=35 // pred_check
          %p305 = pneg %p52
        $region38: #{tpu_custom_call.1} parent=35 // pred_check_branch
          %307 = sbr.rel (%p305) target = $region40
        $region39: #{tpu_custom_call.1} parent=35 // pred_region
          %p308 = scmp.lt.s32.totalorder %s25, 1
          %s309 = scalar_select %p308, %s25, 1
          %p310 = scmp.lt.s32.totalorder %s26, 1
          %s311 = scalar_select %p310, %s26, 1
          %s312 = smul.addr %s309, 2
          %s313 = sadd.s32 %s311, %s312
          %s314 = smul.addr %s313, 4
          %s315 = scalar_lea.vmem %s0, %s314
        $region40: #{tpu_custom_call.1} parent=35 // pred_fallthru
          _
        // Predicated region
        $region41: #{tpu_custom_call.1} parent=35 // pred_check
          %p316 = pneg %p78
        $region42: #{tpu_custom_call.1} parent=35 // pred_check_branch
          %318 = sbr.rel (%p316) target = $region44
        $region43: #{tpu_custom_call.1} parent=35 // pred_region
          %p319 = scmp.lt.s32.totalorder %s25, 1
          %s320 = scalar_select %p319, %s25, 1
          %s321 = smul.addr %s320, 8
          %s322 = smul.addr %s321, 8
          %s323 = scalar_lea.vmem %s1, %s322
        $region44: #{tpu_custom_call.1} parent=35 // pred_fallthru
          _
        // Predicated region
        $region45: #{tpu_custom_call.1} parent=35 // pred_check
          %p324 = pneg %p104
        $region46: #{tpu_custom_call.1} parent=35 // pred_check_branch
          %326 = sbr.rel (%p324) target = $region48
        $region47: #{tpu_custom_call.1} parent=35 // pred_region
          %p327 = scmp.lt.s32.totalorder %s25, 1
          %s328 = scalar_select %p327, %s25, 1
          %s329 = smul.addr %s328, 4
          %s330 = smul.addr %s329, 4
          %s331 = scalar_lea.vmem %s2, %s330
        $region48: #{tpu_custom_call.1} parent=35 // pred_fallthru
          _
        // Predicated region
        $region49: #{tpu_custom_call.1} parent=35 // pred_check
          %p332 = pneg %p132
        $region50: #{tpu_custom_call.1} parent=35 // pred_check_branch
          %334 = sbr.rel (%p332) target = $region52
        $region51: #{tpu_custom_call.1} parent=35 // pred_region
          %s335 = sand.u32 %s122, 1
          %s336 = sand.u32 %s122, 1
          %s337 = smul.addr %s336, 8
          %s338 = scalar_lea.vmem [#allocation2], %s337
          %s339 = smul.addr %s25, 4
          %s340 = sadd.s32 %s26, %s339
          %s341 = smul.addr %s340, 4
          %s342 = scalar_lea.vmem %s3, %s341
          // Predicated region
          $region53: #{tpu_custom_call.1} parent=51 // pred_check
            _
          $region54: #{tpu_custom_call.1} parent=51 // pred_check_branch
            %344 = sbr.rel (0) target = $region56
          $region55: #{tpu_custom_call.1} parent=51 // pred_region
            // Predicated region
            $region57: #{tpu_custom_call.1} parent=55 // pred_check
              _
            $region58: #{tpu_custom_call.1} parent=55 // pred_check_branch
              %346 = sbr.rel target = $region60
            $region59: #{tpu_custom_call.1} parent=55 // pred_region
              // Predicated region
              $region72: #{tpu_custom_call.1} parent=59 // pred_check
                _
              $region73: #{tpu_custom_call.1} parent=59 // pred_check_branch
                %364 = sbr.rel (0) target = $region75
              $region74: #{tpu_custom_call.1} parent=59 // pred_region
                loop: start=0, step=1, limit=1
                $region76: #{tpu_custom_call.1} parent=74 // loop_pre_header
                  _
                $region77: #{tpu_custom_call.1} parent=74 // loop_header
                  %s366 = sphi 0, %s370
                  %p367 = scmp.ge.s32.totalorder %s366, 1
                  %s371 = sphi %s342, %s342
                  %s372 = sphi %s338, %s338
                $region78: #{tpu_custom_call.1} parent=74 // loop_header_branch
                  %369 = sbr.rel (%p367) target = $region82
                $region79: #{tpu_custom_call.1} parent=74 // loop_body
                  _
                $region80: #{tpu_custom_call.1} parent=74 // loop_footer
                  %s370 = sadd.s32 1, %s366
                $region81: #{tpu_custom_call.1} parent=74 // loop_footer_branch
                  %365 = sbr.rel target = $region77
                $region82: #{tpu_custom_call.1} parent=74 // loop_exit
                  _
                %s374 = ssub.s32 16, 1
                loop: start=0, step=1, limit=1
                $region83: #{tpu_custom_call.1} parent=74 // loop_pre_header
                  _
                $region84: #{tpu_custom_call.1} parent=74 // loop_header
                  %s376 = sphi 0, %s380
                  %p377 = scmp.ge.s32.totalorder %s376, 1
                  %s381 = sphi %s342, %s342
                  %s382 = sphi %s338, %s338
                $region85: #{tpu_custom_call.1} parent=74 // loop_header_branch
                  %379 = sbr.rel (%p377) target = $region89
                $region86: #{tpu_custom_call.1} parent=74 // loop_body
                  %v383 = vld [vmem:[%s381] sm:%s374]
                  %384 = vst [vmem:[%s382] sm:%s374] %v383
                  %v385 = vld [vmem:[%s381 + $0x8] sm:%s374]
                  %386 = vst [vmem:[%s382 + $0x4] sm:%s374] %v385
                $region87: #{tpu_custom_call.1} parent=74 // loop_footer
                  %s380 = sadd.s32 1, %s376
                $region88: #{tpu_custom_call.1} parent=74 // loop_footer_branch
                  %375 = sbr.rel target = $region84
                $region89: #{tpu_custom_call.1} parent=74 // loop_exit
                  _
              $region75: #{tpu_custom_call.1} parent=59 // pred_fallthru
                _
            $region60: #{tpu_custom_call.1} parent=55 // pred_fallthru
              _
            // Predicated region
            $region61: #{tpu_custom_call.1} parent=55 // pred_check
              _
            $region62: #{tpu_custom_call.1} parent=55 // pred_check_branch
              %348 = sbr.rel (0) target = $region64
            $region63: #{tpu_custom_call.1} parent=55 // pred_region
              %s350 = ssub.s32 16, 1
              loop: start=0, step=1, limit=1
              $region65: #{tpu_custom_call.1} parent=63 // loop_pre_header
                _
              $region66: #{tpu_custom_call.1} parent=63 // loop_header
                %s352 = sphi 0, %s356
                %p353 = scmp.ge.s32.totalorder %s352, 1
                %s357 = sphi %s342, %s342
                %s358 = sphi %s338, %s338
              $region67: #{tpu_custom_call.1} parent=63 // loop_header_branch
                %355 = sbr.rel (%p353) target = $region71
              $region68: #{tpu_custom_call.1} parent=63 // loop_body
                %v359 = vld [vmem:[%s357] sm:%s350]
                %360 = vst [vmem:[%s358] sm:%s350] %v359
                %v361 = vld [vmem:[%s357 + $0x8] sm:%s350]
                %362 = vst [vmem:[%s358 + $0x4] sm:%s350] %v361
              $region69: #{tpu_custom_call.1} parent=63 // loop_footer
                %s356 = sadd.s32 1, %s352
              $region70: #{tpu_custom_call.1} parent=63 // loop_footer_branch
                %351 = sbr.rel target = $region66
              $region71: #{tpu_custom_call.1} parent=63 // loop_exit
                _
            $region64: #{tpu_custom_call.1} parent=55 // pred_fallthru
              _
          $region56: #{tpu_custom_call.1} parent=51 // pred_fallthru
            _
          %387 = vnop
        $region52: #{tpu_custom_call.1} parent=35 // pred_fallthru
          _
      $region36: #{tpu_custom_call.1} parent=5 // pred_fallthru
        _
      %p388 = scmp.le.s32.totalorder 1, %s18
      %p389 = scmp.lt.s32.totalorder %s18, 5
      %p390 = pnand %p388, %p389
      %p391 = pneg %p390
      // Predicated region
      $region90: #{tpu_custom_call.1} parent=5 // pred_check
        _
      $region91: #{tpu_custom_call.1} parent=5 // pred_check_branch
        %393 = sbr.rel (%p390) target = $region93
      $region92: #{tpu_custom_call.1} parent=5 // pred_region
        %s394 = ssub.s32 %s18, 1
        %s395 = sand.u32 %s125, 1
        %s396 = sand.u32 %s125, 1
        %s397 = smul.addr %s396, 8
        %s398 = scalar_lea.vmem [#allocation2], %s397
        // Predicated region
        $region94: #{tpu_custom_call.1} parent=92 // pred_check
          %p399 = pneg %p138
        $region95: #{tpu_custom_call.1} parent=92 // pred_check_branch
          %401 = sbr.rel (%p399) target = $region97
        $region96: #{tpu_custom_call.1} parent=92 // pred_region
          _
        $region97: #{tpu_custom_call.1} parent=92 // pred_fallthru
          _
        %p402 = scmp.lt.s32.totalorder %s27, 1
        %s403 = scalar_select %p402, %s27, 1
        %p404 = scmp.lt.s32.totalorder %s28, 1
        %s405 = scalar_select %p404, %s28, 1
        %s406 = smul.addr %s403, 2
        %s407 = sadd.s32 %s405, %s406
        %s408 = smul.addr %s407, 4
        %s409 = scalar_lea.vmem %s0, %s408
        %p410 = pneg %p58
        %p411 = pneg %p55
        %p412 = scmp.lt.s32.totalorder %s27, 1
        %s413 = scalar_select %p412, %s27, 1
        %s414 = smul.addr %s413, 8
        %s415 = smul.addr %s414, 8
        %s416 = scalar_lea.vmem %s1, %s415
        %p417 = pneg %p84
        %p418 = pneg %p81
        %p419 = scmp.lt.s32.totalorder %s27, 1
        %s420 = scalar_select %p419, %s27, 1
        %s421 = smul.addr %s420, 4
        %s422 = smul.addr %s421, 4
        %s423 = scalar_lea.vmem %s2, %s422
        %p424 = pneg %p110
        %p425 = pneg %p107
        %s426 = sand.u32 %s125, 1
        %s427 = sand.u32 %s125, 1
        %s428 = smul.addr %s427, 8
        %s429 = scalar_lea.vmem [#allocation2], %s428
        %p430 = pneg %p138
        %p431 = pneg %p135
        %p432 = pneg %p159
        %p433 = pneg %p156
        %p434 = pneg %p180
        %p435 = pneg %p177
        %p436 = pneg %p201
        %p437 = pneg %p198
        %p438 = pneg %p222
        %p439 = pneg %p219
        %p440 = pneg %p243
        %p441 = pneg %p240
        %p442 = pneg %p271
        %p443 = pneg %p268
        %s444 = sand.u32 %s258, 1
        %s445 = scalar_lea.sflag [#allocation4], %s444
        %s446 = sand.u32 %s258, 1
        %s447 = smul.addr %s446, 32
        %s448 = scalar_lea.vmem [#allocation3], %s447
        %p449 = scmp.lt.s32.totalorder %s27, 1
        %s450 = scalar_select %p449, %s27, 1
        %p451 = scmp.lt.s32.totalorder %s28, 1
        %s452 = scalar_select %p451, %s28, 1
        %s453 = smul.addr %s450, 2
        %s454 = sadd.s32 %s452, %s453
        %s455 = smul.addr %s454, 4
        %s456 = scalar_lea.vmem %s0, %s455
        %p457 = scmp.lt.s32.totalorder %s27, 1
        %s458 = scalar_select %p457, %s27, 1
        %s459 = smul.addr %s458, 8
        %s460 = smul.addr %s459, 8
        %s461 = scalar_lea.vmem %s1, %s460
        %p462 = scmp.lt.s32.totalorder %s27, 1
        %s463 = scalar_select %p462, %s27, 1
        %s464 = smul.addr %s463, 4
        %s465 = smul.addr %s464, 4
        %s466 = scalar_lea.vmem %s2, %s465
        %v468 = vld [vmem:[%s456] sm:$0x7]
        %v469 = vld [vmem:[%s461] sm:$0xff]
        %v470 = vld [vmem:[%s461 + $0x8] sm:$0xff]
        %v471 = vld [vmem:[%s461 + $0x10] sm:$0xff]
        %v472 = vld [vmem:[%s461 + $0x18] sm:$0xff]
        %v473 = vld [vmem:[%s461 + $0x20] sm:$0xff]
        %v474 = vld [vmem:[%s461 + $0x28] sm:$0xff]
        %v475 = vld [vmem:[%s461 + $0x30] sm:$0xff]
        %v476 = vld [vmem:[%s461 + $0x38] sm:$0xff]
        %v477 = vld [vmem:[%s466] sm:$0xf]
        %v478 = vld [vmem:[%s466 + $0x4] sm:$0xf]
        %v479 = vld [vmem:[%s466 + $0x8] sm:$0xf]
        %v480 = vld [vmem:[%s466 + $0xc] sm:$0xf]
        %v481 = vld [vmem:[%s398] sm:$0xf]
        %v482 = vld [vmem:[%s398 + $0x4] sm:$0xf]
        %vm483 = vcmask 23552
        %v485 = vsel %vm483, %v469, 0
        %v488 = vsel %vm483, %v470, 0
        %v491 = vsel %vm483, %v471, 0
        %v494 = vsel %vm483, %v472, 0
        %v497 = vsel %vm483, %v473, 0
        %v500 = vsel %vm483, %v474, 0
        %v503 = vsel %vm483, %v475, 0
        %v506 = vsel %vm483, %v476, 0
        %vm508 = vcmask 1042432
        %v510 = vsel %vm508, %v468, 0
        %512 = vmatprep.subr.mxu0 0.0
        %513 = vmatpush1.msra.mxu0 0.0
        %514 = vmatprep.subr.mxu0 0.0
        %515 = vmatpush1.msra.mxu0 0.0
        %516 = vmatprep.subr.mxu0 0.0
        %517 = vmatpush1.msra.mxu0 0.0
        %518 = vmatprep.subr.mxu0 0.0
        %519 = vmatpush1.msra.mxu0 0.0
        %520 = vmatprep.subr.mxu0 0.0
        %521 = vmatpush1.msra.mxu0 0.0
        %522 = vmatprep.subr.mxu0 0.0
        %523 = vmatpush1.msra.mxu0 0.0
        %524 = vmatprep.subr.mxu0 0.0
        %525 = vmatpush1.msra.mxu0 0.0
        %526 = vmatprep.subr.mxu0 0.0
        %527 = vmatpush1.msra.mxu0 0.0
        %528 = vmatprep.subr.mxu0 0.0
        %529 = vmatpush1.msra.mxu0 0.0
        %530 = vmatprep.subr.mxu0 0.0
        %531 = vmatpush1.msra.mxu0 0.0
        %532 = vmatprep.subr.mxu0 0.0
        %533 = vmatpush1.msra.mxu0 0.0
        %534 = vmatprep.subr.mxu0 0.0
        %535 = vmatpush1.msra.mxu0 0.0
        %536 = vmatprep.subr.mxu0 0.0
        %537 = vmatpush1.msra.mxu0 0.0
        %538 = vmatprep.subr.mxu0 0.0
        %539 = vmatpush1.msra.mxu0 0.0
        %540 = vmatprep.subr.mxu0 0.0
        %541 = vmatpush1.msra.mxu0 0.0
        %542 = vmatprep.subr.mxu0 0.0
        %543 = vmatpush1.msra.mxu0 %v510
        %544 = vmatprep.subr.mxu0 0.0
        %545 = vmatpush2.msra.mxu0 0.0
        %546 = vmatprep.subr.mxu0 0.0
        %547 = vmatpush2.msra.mxu0 0.0
        %548 = vmatprep.subr.mxu0 0.0
        %549 = vmatpush2.msra.mxu0 0.0
        %550 = vmatprep.subr.mxu0 0.0
        %551 = vmatpush2.msra.mxu0 0.0
        %552 = vmatprep.subr.mxu0 0.0
        %553 = vmatpush2.msra.mxu0 0.0
        %554 = vmatprep.subr.mxu0 0.0
        %555 = vmatpush2.msra.mxu0 0.0
        %556 = vmatprep.subr.mxu0 0.0
        %557 = vmatpush2.msra.mxu0 0.0
        %558 = vmatprep.subr.mxu0 0.0
        %559 = vmatpush2.msra.mxu0 0.0
        %560 = vmatprep.subr.mxu0 0.0
        %561 = vmatpush2.msra.mxu0 0.0
        %562 = vmatprep.subr.mxu0 0.0
        %563 = vmatpush2.msra.mxu0 0.0
        %564 = vmatprep.subr.mxu0 0.0
        %565 = vmatpush2.msra.mxu0 0.0
        %566 = vmatprep.subr.mxu0 0.0
        %567 = vmatpush2.msra.mxu0 0.0
        %568 = vmatprep.subr.mxu0 0.0
        %569 = vmatpush2.msra.mxu0 0.0
        %570 = vmatprep.subr.mxu0 0.0
        %571 = vmatpush2.msra.mxu0 0.0
        %572 = vmatprep.subr.mxu0 0.0
        %573 = vmatpush2.msra.mxu0 0.0
        %574 = vmatprep.subr.mxu0 0.0
        %575 = vmatpush2.msra.mxu0 0.0
        %576 = vmatprep.mubr.f32.mxu0 0.0
        %577 = vmatmul.mubr.f32.gmra.mxu0 %v485
        %v578 = vpop.f32.mrf.mxu0
        %v579 = vadd.f32 0.0, %v578
        %v580 = vpop.f32.mrf.mxu0
        %581 = vmatprep.mubr.f32.mxu0 0.0
        %582 = vmatmul.mubr.f32.gmra.mxu0 %v488
        %v583 = vpop.f32.mrf.mxu0
        %v584 = vadd.f32 0.0, %v583
        %v585 = vpop.f32.mrf.mxu0
        %586 = vmatprep.mubr.f32.mxu0 0.0
        %587 = vmatmul.mubr.f32.gmra.mxu0 %v491
        %v588 = vpop.f32.mrf.mxu0
        %v589 = vadd.f32 0.0, %v588
        %v590 = vpop.f32.mrf.mxu0
        %591 = vmatprep.mubr.f32.mxu0 0.0
        %592 = vmatmul.mubr.f32.gmra.mxu0 %v494
        %v593 = vpop.f32.mrf.mxu0
        %v594 = vadd.f32 0.0, %v593
        %v595 = vpop.f32.mrf.mxu0
        %596 = vmatprep.mubr.f32.mxu0 0.0
        %597 = vmatmul.mubr.f32.gmra.mxu0 %v497
        %v598 = vpop.f32.mrf.mxu0
        %v599 = vadd.f32 0.0, %v598
        %v600 = vpop.f32.mrf.mxu0
        %601 = vmatprep.mubr.f32.mxu0 0.0
        %602 = vmatmul.mubr.f32.gmra.mxu0 %v500
        %v603 = vpop.f32.mrf.mxu0
        %v604 = vadd.f32 0.0, %v603
        %v605 = vpop.f32.mrf.mxu0
        %606 = vmatprep.mubr.f32.mxu0 0.0
        %607 = vmatmul.mubr.f32.gmra.mxu0 %v503
        %v608 = vpop.f32.mrf.mxu0
        %v609 = vadd.f32 0.0, %v608
        %v610 = vpop.f32.mrf.mxu0
        %611 = vmatprep.mubr.f32.mxu0 0.0
        %612 = vmatmul.mubr.f32.gmra.mxu0 %v506
        %v613 = vpop.f32.mrf.mxu0
        %v614 = vadd.f32 0.0, %v613
        %v615 = vpop.f32.mrf.mxu0
        %616 = vdwg.mxu0
        %v617 = vmul.f32 %v468, %v468
        %v618 = vsel %vm508, %v617, 0.0
        %v619 = vrot.slane %v618, 4
        %v620 = vadd.f32 %v618, %v619
        %v621 = vrot.slane %v620, 2
        %v622 = vadd.f32 %v620, %v621
        %v623 = vrot.slane %v622, 1
        %v624 = vadd.f32 %v622, %v623
        %v625 = vmul.f32 %v469, %v469
        %v626 = vmul.f32 %v470, %v470
        %v627 = vmul.f32 %v471, %v471
        %v628 = vmul.f32 %v472, %v472
        %v629 = vmul.f32 %v473, %v473
        %v630 = vmul.f32 %v474, %v474
        %v631 = vmul.f32 %v475, %v475
        %v632 = vmul.f32 %v476, %v476
        %v633 = vsel %vm483, %v625, 0.0
        %634 = vadd.xlane.f32.xlu0 %v633
        %v635 = vpop.xlane.xlu0 %634
        %v636 = vsel %vm483, %v626, 0.0
        %637 = vadd.xlane.f32.xlu0 %v636
        %v638 = vpop.xlane.xlu0 %637
        %v639 = vsel %vm483, %v627, 0.0
        %640 = vadd.xlane.f32.xlu0 %v639
        %v641 = vpop.xlane.xlu0 %640
        %v642 = vsel %vm483, %v628, 0.0
        %643 = vadd.xlane.f32.xlu0 %v642
        %v644 = vpop.xlane.xlu0 %643
        %v645 = vsel %vm483, %v629, 0.0
        %646 = vadd.xlane.f32.xlu0 %v645
        %v647 = vpop.xlane.xlu0 %646
        %v648 = vsel %vm483, %v630, 0.0
        %649 = vadd.xlane.f32.xlu0 %v648
        %v650 = vpop.xlane.xlu0 %649
        %v651 = vsel %vm483, %v631, 0.0
        %652 = vadd.xlane.f32.xlu0 %v651
        %v653 = vpop.xlane.xlu0 %652
        %v654 = vsel %vm483, %v632, 0.0
        %655 = vadd.xlane.f32.xlu0 %v654
        %v656 = vpop.xlane.xlu0 %655
        %v657 = vadd.f32 %v624, %v635
        %v658 = vadd.f32 %v624, %v638
        %v659 = vadd.f32 %v624, %v641
        %v660 = vadd.f32 %v624, %v644
        %v661 = vadd.f32 %v624, %v647
        %v662 = vadd.f32 %v624, %v650
        %v663 = vadd.f32 %v624, %v653
        %v664 = vadd.f32 %v624, %v656
        %v665 = vmul.f32 %v579, 2.0
        %v666 = vmul.f32 %v584, 2.0
        %v667 = vmul.f32 %v589, 2.0
        %v668 = vmul.f32 %v594, 2.0
        %v669 = vmul.f32 %v599, 2.0
        %v670 = vmul.f32 %v604, 2.0
        %v671 = vmul.f32 %v609, 2.0
        %v672 = vmul.f32 %v614, 2.0
        %v673 = vsub.f32 %v657, %v665
        %v674 = vsub.f32 %v658, %v666
        %v675 = vsub.f32 %v659, %v667
        %v676 = vsub.f32 %v660, %v668
        %v677 = vsub.f32 %v661, %v669
        %v678 = vsub.f32 %v662, %v670
        %v679 = vsub.f32 %v663, %v671
        %v680 = vsub.f32 %v664, %v672
        %v681 = vmax.f32 %v673, 0.0
        %v682 = vmax.f32 %v674, 0.0
        %v683 = vmax.f32 %v675, 0.0
        %v684 = vmax.f32 %v676, 0.0
        %v685 = vmax.f32 %v677, 0.0
        %v686 = vmax.f32 %v678, 0.0
        %v687 = vmax.f32 %v679, 0.0
        %v688 = vmax.f32 %v680, 0.0
        %v689 = vlaneseq
        %v690 = vshrl.u32 %v689, 7
        %v691 = vadd.s32 %v690, 8
        %v692 = vadd.s32 %v690, 16
        %v693 = vadd.s32 %v690, 24
        %v694 = vadd.s32 %v690, 32
        %v695 = vadd.s32 %v690, 40
        %v696 = vadd.s32 %v690, 48
        %v697 = vadd.s32 %v690, 56
        %v706 = vand.u32 %v681, 4294967232
        %v707 = vand.u32 %v682, 4294967232
        %v708 = vand.u32 %v683, 4294967232
        %v709 = vand.u32 %v684, 4294967232
        %v710 = vand.u32 %v685, 4294967232
        %v711 = vand.u32 %v686, 4294967232
        %v712 = vand.u32 %v687, 4294967232
        %v713 = vand.u32 %v688, 4294967232
        %v714 = vor.u32 %v706, %v690
        %v715 = vor.u32 %v707, %v691
        %v716 = vor.u32 %v708, %v692
        %v717 = vor.u32 %v709, %v693
        %v718 = vor.u32 %v710, %v694
        %v719 = vor.u32 %v711, %v695
        %v720 = vor.u32 %v712, %v696
        %v721 = vor.u32 %v713, %v697
        %vm722 = vcmp.lt.s32.totalorder %v714, %v718
        %v723 = vsel %vm722, %v714, %v718
        %vm724 = vcmp.lt.s32.totalorder %v715, %v719
        %v725 = vsel %vm724, %v715, %v719
        %vm726 = vcmp.lt.s32.totalorder %v716, %v720
        %v727 = vsel %vm726, %v716, %v720
        %vm728 = vcmp.lt.s32.totalorder %v717, %v721
        %v729 = vsel %vm728, %v717, %v721
        %vm730 = vcmp.lt.s32.totalorder %v723, %v725
        %v731 = vsel %vm730, %v723, %v725
        %vm732 = vcmp.lt.s32.totalorder %v727, %v729
        %v733 = vsel %vm732, %v727, %v729
        %vm734 = vcmp.lt.s32.totalorder %v731, %v733
        %v735 = vsel %vm734, %v731, %v733
        %v736 = vrot.slane %v735, 4
        %vm737 = vcmp.lt.s32.totalorder %v735, %v736
        %v738 = vsel %vm737, %v735, %v736
        %v739 = vrot.slane %v738, 2
        %vm740 = vcmp.lt.s32.totalorder %v738, %v739
        %v741 = vsel %vm740, %v738, %v739
        %v742 = vrot.slane %v741, 1
        %vm743 = vcmp.lt.s32.totalorder %v741, %v742
        %v744 = vsel %vm743, %v741, %v742
        %vm745 = vcmp.eq.s32.totalorder %v714, %v744
        %vm746 = vcmp.eq.s32.totalorder %v715, %v744
        %vm747 = vcmp.eq.s32.totalorder %v716, %v744
        %vm748 = vcmp.eq.s32.totalorder %v717, %v744
        %vm749 = vcmp.eq.s32.totalorder %v718, %v744
        %vm750 = vcmp.eq.s32.totalorder %v719, %v744
        %vm751 = vcmp.eq.s32.totalorder %v720, %v744
        %vm752 = vcmp.eq.s32.totalorder %v721, %v744
        %v753 = vsel %vm745, 2147483647, %v714
        %v754 = vsel %vm746, 2147483647, %v715
        %v755 = vsel %vm747, 2147483647, %v716
        %v756 = vsel %vm748, 2147483647, %v717
        %v757 = vsel %vm749, 2147483647, %v718
        %v758 = vsel %vm750, 2147483647, %v719
        %v759 = vsel %vm751, 2147483647, %v720
        %v760 = vsel %vm752, 2147483647, %v721
        %vm761 = vcmp.lt.s32.totalorder %v753, %v757
        %v762 = vsel %vm761, %v753, %v757
        %vm763 = vcmp.lt.s32.totalorder %v754, %v758
        %v764 = vsel %vm763, %v754, %v758
        %vm765 = vcmp.lt.s32.totalorder %v755, %v759
        %v766 = vsel %vm765, %v755, %v759
        %vm767 = vcmp.lt.s32.totalorder %v756, %v760
        %v768 = vsel %vm767, %v756, %v760
        %vm769 = vcmp.lt.s32.totalorder %v762, %v764
        %v770 = vsel %vm769, %v762, %v764
        %vm771 = vcmp.lt.s32.totalorder %v766, %v768
        %v772 = vsel %vm771, %v766, %v768
        %vm773 = vcmp.lt.s32.totalorder %v770, %v772
        %v774 = vsel %vm773, %v770, %v772
        %v775 = vrot.slane %v774, 4
        %vm776 = vcmp.lt.s32.totalorder %v774, %v775
        %v777 = vsel %vm776, %v774, %v775
        %v778 = vrot.slane %v777, 2
        %vm779 = vcmp.lt.s32.totalorder %v777, %v778
        %v780 = vsel %vm779, %v777, %v778
        %v781 = vrot.slane %v780, 1
        %vm782 = vcmp.lt.s32.totalorder %v780, %v781
        %v783 = vsel %vm782, %v780, %v781
        %vm784 = vcmp.eq.s32.totalorder %v753, %v783
        %vm785 = vcmp.eq.s32.totalorder %v754, %v783
        %vm786 = vcmp.eq.s32.totalorder %v755, %v783
        %vm787 = vcmp.eq.s32.totalorder %v756, %v783
        %vm788 = vcmp.eq.s32.totalorder %v757, %v783
        %vm789 = vcmp.eq.s32.totalorder %v758, %v783
        %vm790 = vcmp.eq.s32.totalorder %v759, %v783
        %vm791 = vcmp.eq.s32.totalorder %v760, %v783
        %v792 = vsel %vm784, 2147483647, %v753
        %v793 = vsel %vm785, 2147483647, %v754
        %v794 = vsel %vm786, 2147483647, %v755
        %v795 = vsel %vm787, 2147483647, %v756
        %v796 = vsel %vm788, 2147483647, %v757
        %v797 = vsel %vm789, 2147483647, %v758
        %v798 = vsel %vm790, 2147483647, %v759
        %v799 = vsel %vm791, 2147483647, %v760
        %vm800 = vcmp.lt.s32.totalorder %v792, %v796
        %v801 = vsel %vm800, %v792, %v796
        %vm802 = vcmp.lt.s32.totalorder %v793, %v797
        %v803 = vsel %vm802, %v793, %v797
        %vm804 = vcmp.lt.s32.totalorder %v794, %v798
        %v805 = vsel %vm804, %v794, %v798
        %vm806 = vcmp.lt.s32.totalorder %v795, %v799
        %v807 = vsel %vm806, %v795, %v799
        %vm808 = vcmp.lt.s32.totalorder %v801, %v803
        %v809 = vsel %vm808, %v801, %v803
        %vm810 = vcmp.lt.s32.totalorder %v805, %v807
        %v811 = vsel %vm810, %v805, %v807
        %vm812 = vcmp.lt.s32.totalorder %v809, %v811
        %v813 = vsel %vm812, %v809, %v811
        %v814 = vrot.slane %v813, 4
        %vm815 = vcmp.lt.s32.totalorder %v813, %v814
        %v816 = vsel %vm815, %v813, %v814
        %v817 = vrot.slane %v816, 2
        %vm818 = vcmp.lt.s32.totalorder %v816, %v817
        %v819 = vsel %vm818, %v816, %v817
        %v820 = vrot.slane %v819, 1
        %vm821 = vcmp.lt.s32.totalorder %v819, %v820
        %v822 = vsel %vm821, %v819, %v820
        %vm823 = vcmp.eq.s32.totalorder %v792, %v822
        %vm824 = vcmp.eq.s32.totalorder %v793, %v822
        %vm825 = vcmp.eq.s32.totalorder %v794, %v822
        %vm826 = vcmp.eq.s32.totalorder %v795, %v822
        %vm827 = vcmp.eq.s32.totalorder %v796, %v822
        %vm828 = vcmp.eq.s32.totalorder %v797, %v822
        %vm829 = vcmp.eq.s32.totalorder %v798, %v822
        %vm830 = vcmp.eq.s32.totalorder %v799, %v822
        %v831 = vand.u32 %v744, 4294967232
        %v833 = vadd.f32 %v831, 1e-08
        %v834 = vrcp.pop %v833
        %v835 = vmul.f32 1.0, %v834
        %v836 = vand.u32 %v783, 4294967232
        %v838 = vadd.f32 %v836, 1e-08
        %v839 = vrcp.pop %v838
        %v840 = vmul.f32 1.0, %v839
        %v841 = vand.u32 %v822, 4294967232
        %v843 = vadd.f32 %v841, 1e-08
        %v844 = vrcp.pop %v843
        %v845 = vmul.f32 1.0, %v844
        %v846 = vadd.f32 %v835, %v840
        %v847 = vadd.f32 %v846, %v845
        %v848 = vrcp.pop %v847
        %v849 = vsel %vm823, %v845, 0.0
        %v850 = vsel %vm824, %v845, 0.0
        %v851 = vsel %vm825, %v845, 0.0
        %v852 = vsel %vm826, %v845, 0.0
        %v853 = vsel %vm827, %v845, 0.0
        %v854 = vsel %vm828, %v845, 0.0
        %v855 = vsel %vm829, %v845, 0.0
        %v856 = vsel %vm830, %v845, 0.0
        %v857 = vsel %vm784, %v840, %v849
        %v858 = vsel %vm785, %v840, %v850
        %v859 = vsel %vm786, %v840, %v851
        %v860 = vsel %vm787, %v840, %v852
        %v861 = vsel %vm788, %v840, %v853
        %v862 = vsel %vm789, %v840, %v854
        %v863 = vsel %vm790, %v840, %v855
        %v864 = vsel %vm791, %v840, %v856
        %v865 = vsel %vm745, %v835, %v857
        %v866 = vsel %vm746, %v835, %v858
        %v867 = vsel %vm747, %v835, %v859
        %v868 = vsel %vm748, %v835, %v860
        %v869 = vsel %vm749, %v835, %v861
        %v870 = vsel %vm750, %v835, %v862
        %v871 = vsel %vm751, %v835, %v863
        %v872 = vsel %vm752, %v835, %v864
        %v873 = vpack.c.bf16 %v866, %v865
        %v874 = vpack.c.bf16 %v868, %v867
        %v875 = vpack.c.bf16 %v870, %v869
        %v876 = vpack.c.bf16 %v872, %v871
        %v881 = vunpack.c.l.b16 %v477
        %v882 = vunpack.c.l.b16 %v478
        %v883 = vunpack.c.l.b16 %v479
        %v884 = vunpack.c.l.b16 %v480
        %v885 = vpack.c.b16 %v882, %v881
        %v886 = vpack.c.b16 %v884, %v883
        %vm887 = vcmask 523264
        %v889 = vsel %vm887, %v885, 0
        %v892 = vsel %vm887, %v886, 0
        %894 = vmatprep.subr.bf16.mxu0 0
        %895 = vmatpush1.bf16.msra.mxu0 0
        %896 = vmatprep.subr.bf16.mxu0 0
        %897 = vmatpush1.bf16.msra.mxu0 0
        %898 = vmatprep.subr.bf16.mxu0 0
        %899 = vmatpush1.bf16.msra.mxu0 0
        %900 = vmatprep.subr.bf16.mxu0 0
        %901 = vmatpush1.bf16.msra.mxu0 0
        %902 = vmatprep.subr.bf16.mxu0 0
        %903 = vmatpush1.bf16.msra.mxu0 %v876
        %904 = vmatprep.subr.bf16.mxu0 0
        %905 = vmatpush1.bf16.msra.mxu0 %v875
        %906 = vmatprep.subr.bf16.mxu0 0
        %907 = vmatpush1.bf16.msra.mxu0 %v874
        %908 = vmatprep.subr.bf16.mxu0 0
        %909 = vmatpush1.bf16.msra.mxu0 %v873
        %910 = vmatprep.subr.bf16.mxu0 0
        %911 = vmatpush2.bf16.msra.mxu0 0
        %912 = vmatprep.subr.bf16.mxu0 0
        %913 = vmatpush2.bf16.msra.mxu0 0
        %914 = vmatprep.subr.bf16.mxu0 0
        %915 = vmatpush2.bf16.msra.mxu0 0
        %916 = vmatprep.subr.bf16.mxu0 0
        %917 = vmatpush2.bf16.msra.mxu0 0
        %918 = vmatprep.subr.bf16.mxu0 0
        %919 = vmatpush2.bf16.msra.mxu0 0
        %920 = vmatprep.subr.bf16.mxu0 0
        %921 = vmatpush2.bf16.msra.mxu0 0
        %922 = vmatprep.subr.bf16.mxu0 0
        %923 = vmatpush2.bf16.msra.mxu0 0
        %924 = vmatprep.subr.bf16.mxu0 0
        %925 = vmatpush2.bf16.msra.mxu0 0
        %926 = vmatprep.mubr.bf16.mxu0 0
        %927 = vmatmul.mubr.bf16.gmra.mxu0 %v889
        %v928 = vpop.f32.mrf.mxu0
        %v929 = vadd.f32 0.0, %v928
        %v930 = vpop.f32.mrf.mxu0
        %v931 = vpop.f32.mrf.mxu0
        %v932 = vadd.f32 0.0, %v931
        %v933 = vpop.f32.mrf.mxu0
        %934 = vmatprep.mubr.bf16.mxu0 0
        %935 = vmatmul.mubr.bf16.gmra.mxu0 %v892
        %v936 = vpop.f32.mrf.mxu0
        %v937 = vadd.f32 0.0, %v936
        %v938 = vpop.f32.mrf.mxu0
        %v939 = vpop.f32.mrf.mxu0
        %v940 = vadd.f32 0.0, %v939
        %v941 = vpop.f32.mrf.mxu0
        %942 = vdwg.mxu0
        %v943 = vmul.f32 %v929, %v848
        %v944 = vmul.f32 %v932, %v848
        %v945 = vmul.f32 %v937, %v848
        %v946 = vmul.f32 %v940, %v848
        %v947 = vpack.c.bf16 %v944, %v943
        %v948 = vpack.c.bf16 %v946, %v945
        %v949 = vld [vmem:[%s4] sm:$0xf]
        %v950 = vld [vmem:[%s4 + $0x4] sm:$0xf]
        %v951 = vld [vmem:[%s4 + $0x8] sm:$0xf]
        %v952 = vld [vmem:[%s4 + $0xc] sm:$0xf]
        %v953 = vld [vmem:[%s4 + $0x10] sm:$0xf]
        %v954 = vld [vmem:[%s4 + $0x14] sm:$0xf]
        %v955 = vld [vmem:[%s4 + $0x18] sm:$0xf]
        %v956 = vld [vmem:[%s4 + $0x1c] sm:$0xf]
        %v957 = vld [vmem:[%s5] sm:$0xf]
        %v958 = vld [vmem:[%s5 + $0x4] sm:$0xf]
        %v959 = vld [vmem:[%s5 + $0x8] sm:$0xf]
        %v960 = vld [vmem:[%s5 + $0xc] sm:$0xf]
        %v961 = vld [vmem:[%s5 + $0x10] sm:$0xf]
        %v962 = vld [vmem:[%s5 + $0x14] sm:$0xf]
        %v963 = vld [vmem:[%s5 + $0x18] sm:$0xf]
        %v964 = vld [vmem:[%s5 + $0x1c] sm:$0xf]
        %v973 = vunpack.c.l.b16 %v957
        %v974 = vunpack.c.l.b16 %v958
        %v975 = vunpack.c.l.b16 %v959
        %v976 = vunpack.c.l.b16 %v960
        %v977 = vunpack.c.l.b16 %v961
        %v978 = vunpack.c.l.b16 %v962
        %v979 = vunpack.c.l.b16 %v963
        %v980 = vunpack.c.l.b16 %v964
        %v981 = vpack.c.b16 %v974, %v973
        %v982 = vpack.c.b16 %v976, %v975
        %v983 = vpack.c.b16 %v978, %v977
        %v984 = vpack.c.b16 %v980, %v979
        %v987 = vunpack.c.l.b16 %v481
        %v988 = vunpack.c.l.b16 %v482
        %v989 = vpack.c.b16 %v988, %v987
        %vm991 = vcmask 130048
        %v993 = vsel %vm991, %v981, 0
        %v996 = vsel %vm991, %v982, 0
        %v999 = vsel %vm991, %v983, 0
        %v1002 = vsel %vm991, %v984, 0
        %1004 = vmatprep.subr.bf16.mxu0 0
        %1005 = vmatpush1.bf16.msra.mxu0 0
        %1006 = vmatprep.subr.bf16.mxu0 0
        %1007 = vmatpush1.bf16.msra.mxu0 0
        %1008 = vmatprep.subr.bf16.mxu0 0
        %1009 = vmatpush1.bf16.msra.mxu0 0
        %1010 = vmatprep.subr.bf16.mxu0 0
        %1011 = vmatpush1.bf16.msra.mxu0 0
        %1012 = vmatprep.subr.bf16.mxu0 0
        %1013 = vmatpush1.bf16.msra.mxu0 0
        %1014 = vmatprep.subr.bf16.mxu0 0
        %1015 = vmatpush1.bf16.msra.mxu0 0
        %1016 = vmatprep.subr.bf16.mxu0 0
        %1017 = vmatpush1.bf16.msra.mxu0 0
        %1018 = vmatprep.subr.bf16.mxu0 0
        %1019 = vmatpush1.bf16.msra.mxu0 %v989
        %1020 = vmatprep.subr.bf16.mxu0 0
        %1021 = vmatpush2.bf16.msra.mxu0 0
        %1022 = vmatprep.subr.bf16.mxu0 0
        %1023 = vmatpush2.bf16.msra.mxu0 0
        %1024 = vmatprep.subr.bf16.mxu0 0
        %1025 = vmatpush2.bf16.msra.mxu0 0
        %1026 = vmatprep.subr.bf16.mxu0 0
        %1027 = vmatpush2.bf16.msra.mxu0 0
        %1028 = vmatprep.subr.bf16.mxu0 0
        %1029 = vmatpush2.bf16.msra.mxu0 0
        %1030 = vmatprep.subr.bf16.mxu0 0
        %1031 = vmatpush2.bf16.msra.mxu0 0
        %1032 = vmatprep.subr.bf16.mxu0 0
        %1033 = vmatpush2.bf16.msra.mxu0 0
        %1034 = vmatprep.subr.bf16.mxu0 0
        %1035 = vmatpush2.bf16.msra.mxu0 0
        %1036 = vmatprep.mubr.bf16.mxu0 0
        %1037 = vmatmul.mubr.bf16.gmra.mxu0 %v993
        %v1038 = vpop.f32.mrf.mxu0
        %v1039 = vadd.f32 0.0, %v1038
        %v1040 = vpop.f32.mrf.mxu0
        %v1041 = vpop.f32.mrf.mxu0
        %v1042 = vadd.f32 0.0, %v1041
        %v1043 = vpop.f32.mrf.mxu0
        %1044 = vmatprep.mubr.bf16.mxu0 0
        %1045 = vmatmul.mubr.bf16.gmra.mxu0 %v996
        %v1046 = vpop.f32.mrf.mxu0
        %v1047 = vadd.f32 0.0, %v1046
        %v1048 = vpop.f32.mrf.mxu0
        %v1049 = vpop.f32.mrf.mxu0
        %v1050 = vadd.f32 0.0, %v1049
        %v1051 = vpop.f32.mrf.mxu0
        %1052 = vmatprep.mubr.bf16.mxu0 0
        %1053 = vmatmul.mubr.bf16.gmra.mxu0 %v999
        %v1054 = vpop.f32.mrf.mxu0
        %v1055 = vadd.f32 0.0, %v1054
        %v1056 = vpop.f32.mrf.mxu0
        %v1057 = vpop.f32.mrf.mxu0
        %v1058 = vadd.f32 0.0, %v1057
        %v1059 = vpop.f32.mrf.mxu0
        %1060 = vmatprep.mubr.bf16.mxu0 0
        %1061 = vmatmul.mubr.bf16.gmra.mxu0 %v1002
        %v1062 = vpop.f32.mrf.mxu0
        %v1063 = vadd.f32 0.0, %v1062
        %v1064 = vpop.f32.mrf.mxu0
        %v1065 = vpop.f32.mrf.mxu0
        %v1066 = vadd.f32 0.0, %v1065
        %v1067 = vpop.f32.mrf.mxu0
        %1068 = vdwg.mxu0
        %v1077 = vunpack.c.l.b16 %v949
        %v1078 = vunpack.c.l.b16 %v950
        %v1079 = vunpack.c.l.b16 %v951
        %v1080 = vunpack.c.l.b16 %v952
        %v1081 = vunpack.c.l.b16 %v953
        %v1082 = vunpack.c.l.b16 %v954
        %v1083 = vunpack.c.l.b16 %v955
        %v1084 = vunpack.c.l.b16 %v956
        %v1085 = vpack.c.b16 %v1078, %v1077
        %v1086 = vpack.c.b16 %v1080, %v1079
        %v1087 = vpack.c.b16 %v1082, %v1081
        %v1088 = vpack.c.b16 %v1084, %v1083
        %vm1089 = vcmask 261120
        %v1091 = vsel %vm1089, %v1085, 0
        %v1094 = vsel %vm1089, %v1086, 0
        %v1097 = vsel %vm1089, %v1087, 0
        %v1100 = vsel %vm1089, %v1088, 0
        %1102 = vmatprep.subr.bf16.mxu0 0
        %1103 = vmatpush1.bf16.msra.mxu0 0
        %1104 = vmatprep.subr.bf16.mxu0 0
        %1105 = vmatpush1.bf16.msra.mxu0 0
        %1106 = vmatprep.subr.bf16.mxu0 0
        %1107 = vmatpush1.bf16.msra.mxu0 0
        %1108 = vmatprep.subr.bf16.mxu0 0
        %1109 = vmatpush1.bf16.msra.mxu0 0
        %1110 = vmatprep.subr.bf16.mxu0 0
        %1111 = vmatpush1.bf16.msra.mxu0 0
        %1112 = vmatprep.subr.bf16.mxu0 0
        %1113 = vmatpush1.bf16.msra.mxu0 0
        %1114 = vmatprep.subr.bf16.mxu0 0
        %1115 = vmatpush1.bf16.msra.mxu0 %v948
        %1116 = vmatprep.subr.bf16.mxu0 0
        %1117 = vmatpush1.bf16.msra.mxu0 %v947
        %1118 = vmatprep.subr.bf16.mxu0 0
        %1119 = vmatpush2.bf16.msra.mxu0 0
        %1120 = vmatprep.subr.bf16.mxu0 0
        %1121 = vmatpush2.bf16.msra.mxu0 0
        %1122 = vmatprep.subr.bf16.mxu0 0
        %1123 = vmatpush2.bf16.msra.mxu0 0
        %1124 = vmatprep.subr.bf16.mxu0 0
        %1125 = vmatpush2.bf16.msra.mxu0 0
        %1126 = vmatprep.subr.bf16.mxu0 0
        %1127 = vmatpush2.bf16.msra.mxu0 0
        %1128 = vmatprep.subr.bf16.mxu0 0
        %1129 = vmatpush2.bf16.msra.mxu0 0
        %1130 = vmatprep.subr.bf16.mxu0 0
        %1131 = vmatpush2.bf16.msra.mxu0 0
        %1132 = vmatprep.subr.bf16.mxu0 0
        %1133 = vmatpush2.bf16.msra.mxu0 0
        %1134 = vmatprep.mubr.bf16.mxu0 0
        %1135 = vmatmul.mubr.bf16.gmra.mxu0 %v1091
        %v1136 = vpop.f32.mrf.mxu0
        %v1137 = vadd.f32 %v1039, %v1136
        %v1138 = vpop.f32.mrf.mxu0
        %v1139 = vpop.f32.mrf.mxu0
        %v1140 = vadd.f32 %v1042, %v1139
        %v1141 = vpop.f32.mrf.mxu0
        %1142 = vmatprep.mubr.bf16.mxu0 0
        %1143 = vmatmul.mubr.bf16.gmra.mxu0 %v1094
        %v1144 = vpop.f32.mrf.mxu0
        %v1145 = vadd.f32 %v1047, %v1144
        %v1146 = vpop.f32.mrf.mxu0
        %v1147 = vpop.f32.mrf.mxu0
        %v1148 = vadd.f32 %v1050, %v1147
        %v1149 = vpop.f32.mrf.mxu0
        %1150 = vmatprep.mubr.bf16.mxu0 0
        %1151 = vmatmul.mubr.bf16.gmra.mxu0 %v1097
        %v1152 = vpop.f32.mrf.mxu0
        %v1153 = vadd.f32 %v1055, %v1152
        %v1154 = vpop.f32.mrf.mxu0
        %v1155 = vpop.f32.mrf.mxu0
        %v1156 = vadd.f32 %v1058, %v1155
        %v1157 = vpop.f32.mrf.mxu0
        %1158 = vmatprep.mubr.bf16.mxu0 0
        %1159 = vmatmul.mubr.bf16.gmra.mxu0 %v1100
        %v1160 = vpop.f32.mrf.mxu0
        %v1161 = vadd.f32 %v1063, %v1160
        %v1162 = vpop.f32.mrf.mxu0
        %v1163 = vpop.f32.mrf.mxu0
        %v1164 = vadd.f32 %v1066, %v1163
        %v1165 = vpop.f32.mrf.mxu0
        %1166 = vdwg.mxu0
        %v1167 = vld [vmem:[%s6] sm:$0xff]
        %v1168 = vld [vmem:[%s6 + $0x8] sm:$0xff]
        %v1169 = vld [vmem:[%s6 + $0x10] sm:$0xff]
        %v1170 = vld [vmem:[%s6 + $0x18] sm:$0xff]
        %v1171 = vld [vmem:[%s6 + $0x20] sm:$0xff]
        %v1172 = vld [vmem:[%s6 + $0x28] sm:$0xff]
        %v1173 = vld [vmem:[%s6 + $0x30] sm:$0xff]
        %v1174 = vld [vmem:[%s6 + $0x38] sm:$0xff]
        %1176 = vset.pattern.permute.xlu0 0
        %1177 = vperm.xlu0 %1176, %v1167
        %v1178 = vpop.permute.xlu0 %1177
        %1181 = vset.pattern.permute.xlu0 0
        %1182 = vperm.xlu0 %1181, %v1168
        %v1183 = vpop.permute.xlu0 %1182
        %1186 = vset.pattern.permute.xlu0 0
        %1187 = vperm.xlu0 %1186, %v1169
        %v1188 = vpop.permute.xlu0 %1187
        %1191 = vset.pattern.permute.xlu0 0
        %1192 = vperm.xlu0 %1191, %v1170
        %v1193 = vpop.permute.xlu0 %1192
        %1196 = vset.pattern.permute.xlu0 0
        %1197 = vperm.xlu0 %1196, %v1171
        %v1198 = vpop.permute.xlu0 %1197
        %1201 = vset.pattern.permute.xlu0 0
        %1202 = vperm.xlu0 %1201, %v1172
        %v1203 = vpop.permute.xlu0 %1202
        %1206 = vset.pattern.permute.xlu0 0
        %1207 = vperm.xlu0 %1206, %v1173
        %v1208 = vpop.permute.xlu0 %1207
        %1211 = vset.pattern.permute.xlu0 0
        %1212 = vperm.xlu0 %1211, %v1174
        %v1213 = vpop.permute.xlu0 %1212
        %v1215 = vadd.f32 %v1137, %v1178
        %v1216 = vadd.f32 %v1140, %v1183
        %v1217 = vadd.f32 %v1145, %v1188
        %v1218 = vadd.f32 %v1148, %v1193
        %v1219 = vadd.f32 %v1153, %v1198
        %v1220 = vadd.f32 %v1156, %v1203
        %v1221 = vadd.f32 %v1161, %v1208
        %v1222 = vadd.f32 %v1164, %v1213
        %v1223 = vmax.f32 %v1215, 0.0
        %v1224 = vmax.f32 %v1216, 0.0
        %v1225 = vmax.f32 %v1217, 0.0
        %v1226 = vmax.f32 %v1218, 0.0
        %v1227 = vmax.f32 %v1219, 0.0
        %v1228 = vmax.f32 %v1220, 0.0
        %v1229 = vmax.f32 %v1221, 0.0
        %v1230 = vmax.f32 %v1222, 0.0
        %v1231 = vld [vmem:[%s7] sm:$0xf]
        %v1232 = vld [vmem:[%s7 + $0x4] sm:$0xf]
        %v1233 = vld [vmem:[%s7 + $0x8] sm:$0xf]
        %v1234 = vld [vmem:[%s7 + $0xc] sm:$0xf]
        %v1235 = vld [vmem:[%s8] sm:$0xff]
        %v1236 = vld [vmem:[%s8 + $0x8] sm:$0xff]
        %v1237 = vld [vmem:[%s8 + $0x10] sm:$0xff]
        %v1238 = vld [vmem:[%s8 + $0x18] sm:$0xff]
        %v1239 = vpack.c.bf16 %v1224, %v1223
        %v1240 = vpack.c.bf16 %v1226, %v1225
        %v1241 = vpack.c.bf16 %v1228, %v1227
        %v1242 = vpack.c.bf16 %v1230, %v1229
        %1244 = vset.pattern.permute.xlu0 0
        %1245 = vperm.xlu0 %1244, %v1235
        %v1246 = vpop.permute.xlu0 %1245
        %1249 = vset.pattern.permute.xlu0 0
        %1250 = vperm.xlu0 %1249, %v1236
        %v1251 = vpop.permute.xlu0 %1250
        %1254 = vset.pattern.permute.xlu0 0
        %1255 = vperm.xlu0 %1254, %v1237
        %v1256 = vpop.permute.xlu0 %1255
        %1259 = vset.pattern.permute.xlu0 0
        %1260 = vperm.xlu0 %1259, %v1238
        %v1261 = vpop.permute.xlu0 %1260
        %v1267 = vunpack.c.l.b16 %v1231
        %v1268 = vunpack.c.l.b16 %v1232
        %v1269 = vunpack.c.l.b16 %v1233
        %v1270 = vunpack.c.l.b16 %v1234
        %v1271 = vpack.c.b16 %v1268, %v1267
        %v1272 = vpack.c.b16 %v1270, %v1269
        %v1274 = vsel %vm887, %v1271, 0
        %v1277 = vsel %vm887, %v1272, 0
        %1279 = vmatprep.subr.bf16.mxu0 0
        %1280 = vmatpush1.bf16.msra.mxu0 0
        %1281 = vmatprep.subr.bf16.mxu0 0
        %1282 = vmatpush1.bf16.msra.mxu0 0
        %1283 = vmatprep.subr.bf16.mxu0 0
        %1284 = vmatpush1.bf16.msra.mxu0 0
        %1285 = vmatprep.subr.bf16.mxu0 0
        %1286 = vmatpush1.bf16.msra.mxu0 0
        %1287 = vmatprep.subr.bf16.mxu0 0
        %1288 = vmatpush1.bf16.msra.mxu0 %v1242
        %1289 = vmatprep.subr.bf16.mxu0 0
        %1290 = vmatpush1.bf16.msra.mxu0 %v1241
        %1291 = vmatprep.subr.bf16.mxu0 0
        %1292 = vmatpush1.bf16.msra.mxu0 %v1240
        %1293 = vmatprep.subr.bf16.mxu0 0
        %1294 = vmatpush1.bf16.msra.mxu0 %v1239
        %1295 = vmatprep.subr.bf16.mxu0 0
        %1296 = vmatpush2.bf16.msra.mxu0 0
        %1297 = vmatprep.subr.bf16.mxu0 0
        %1298 = vmatpush2.bf16.msra.mxu0 0
        %1299 = vmatprep.subr.bf16.mxu0 0
        %1300 = vmatpush2.bf16.msra.mxu0 0
        %1301 = vmatprep.subr.bf16.mxu0 0
        %1302 = vmatpush2.bf16.msra.mxu0 0
        %1303 = vmatprep.subr.bf16.mxu0 0
        %1304 = vmatpush2.bf16.msra.mxu0 0
        %1305 = vmatprep.subr.bf16.mxu0 0
        %1306 = vmatpush2.bf16.msra.mxu0 0
        %1307 = vmatprep.subr.bf16.mxu0 0
        %1308 = vmatpush2.bf16.msra.mxu0 0
        %1309 = vmatprep.subr.bf16.mxu0 0
        %1310 = vmatpush2.bf16.msra.mxu0 0
        %1311 = vmatprep.mubr.bf16.mxu0 0
        %1312 = vmatmul.mubr.bf16.gmra.mxu0 %v1274
        %v1313 = vpop.f32.mrf.mxu0
        %v1314 = vadd.f32 %v1246, %v1313
        %v1315 = vpop.f32.mrf.mxu0
        %v1316 = vpop.f32.mrf.mxu0
        %v1317 = vadd.f32 %v1251, %v1316
        %v1318 = vpop.f32.mrf.mxu0
        %1319 = vmatprep.mubr.bf16.mxu0 0
        %1320 = vmatmul.mubr.bf16.gmra.mxu0 %v1277
        %v1321 = vpop.f32.mrf.mxu0
        %v1322 = vadd.f32 %v1256, %v1321
        %v1323 = vpop.f32.mrf.mxu0
        %v1324 = vpop.f32.mrf.mxu0
        %v1325 = vadd.f32 %v1261, %v1324
        %v1326 = vpop.f32.mrf.mxu0
        %1327 = vdwg.mxu0
        %v1328 = vmax.f32 %v1314, 0.0
        %v1329 = vmax.f32 %v1317, 0.0
        %v1330 = vmax.f32 %v1322, 0.0
        %v1331 = vmax.f32 %v1325, 0.0
        %1332 = vst [vmem:[%s448] sm:$0xff] %v1328
        %1333 = vst [vmem:[%s448 + $0x8] sm:$0xff] %v1329
        %1334 = vst [vmem:[%s448 + $0x10] sm:$0xff] %v1330
        %1335 = vst [vmem:[%s448 + $0x18] sm:$0xff] %v1331
        %s1336 = sand.u32 %s258, 1
        %s1337 = scalar_lea.sflag [#allocation4], %s1336
        %s1338 = sand.u32 %s258, 1
        %s1339 = smul.addr %s1338, 32
        %s1340 = scalar_lea.vmem [#allocation3], %s1339
        // Predicated region
        $region98: #{tpu_custom_call.1} parent=92 // pred_check
          %p1341 = pneg %p268
        $region99: #{tpu_custom_call.1} parent=92 // pred_check_branch
          %1343 = sbr.rel (%p1341) target = $region101
        $region100: #{tpu_custom_call.1} parent=92 // pred_region
          %s1345 = ssub.s32 512, 512
          %1346 = vsyncadd %s1337, %s1345
          %s1347 = smul.addr %s27, 8
          %s1348 = sadd.s32 %s28, %s1347
          %s1349 = smul.addr %s1348, 128
          %s1350 = scalar_lea.hbm %s9, %s1349
          %s1351 = sshll.u32 %s1340, 4
          %s1352 = int_to_ptr.vmem [resolvable:$true] %s1351
          %1357 = dma.vmem_to_hbm [thread:$0]  %s1352, 512, %s1350, %s1337, 128, 256, 8
        $region101: #{tpu_custom_call.1} parent=92 // pred_fallthru
          _
      $region93: #{tpu_custom_call.1} parent=5 // pred_fallthru
        _
      %p1358 = scmp.le.s32.totalorder 2, %s18
      // Predicated region
      $region102: #{tpu_custom_call.1} parent=5 // pred_check
        %p1359 = pneg %p1358
      $region103: #{tpu_custom_call.1} parent=5 // pred_check_branch
        %1361 = sbr.rel (%p1359) target = $region105
      $region104: #{tpu_custom_call.1} parent=5 // pred_region
        %s1362 = ssub.s32 %s18, 2
        // Predicated region
        $region106: #{tpu_custom_call.1} parent=104 // pred_check
          %p1363 = pneg %p274
        $region107: #{tpu_custom_call.1} parent=104 // pred_check_branch
          %1365 = sbr.rel (%p1363) target = $region109
        $region108: #{tpu_custom_call.1} parent=104 // pred_region
          %s1366 = sand.u32 %s259, 1
          %s1367 = scalar_lea.sflag [#allocation4], %s1366
          %s1368 = sand.u32 %s259, 1
          %s1369 = smul.addr %s1368, 32
          %s1370 = scalar_lea.vmem [#allocation3], %s1369
          %1371 = dma.done %s1367, 512
        $region109: #{tpu_custom_call.1} parent=104 // pred_fallthru
          _
      $region105: #{tpu_custom_call.1} parent=5 // pred_fallthru
        _
    $region6: #{tpu_custom_call.1} parent=1 // loop_footer
      %s22 = sadd.s32 1, %s18
    $region7: #{tpu_custom_call.1} parent=1 // loop_footer_branch
      %17 = sbr.rel target = $region3
    $region8: #{tpu_custom_call.1} parent=1 // loop_exit
      _
    %1372 = vsyncpa [#allocation4], 1
    %s1373 = scalar_lea.sflag [#allocation4], 1
    %1374 = vsyncpa %s1373, 1

</llo_original>
